<compile_context>
chip_gen: v7x
topology: tpu7x:2x2x1
jax: 0.10.0
libtpu: 0.0.40
codegen_flags: <defaults>
</compile_context>

<pallas_src>
import jax
import jax.numpy as jnp
from jax.experimental import pallas as pl
from jax.experimental.pallas import tpu as pltpu


# ----------------------------------------------------------------------------
# Fused MFA kernel factory
# ----------------------------------------------------------------------------
def _make_mfa_kernel(branches, c_mid, c_tot, c_out, c_red, H, W):
    Wp = W + 2                     # padded width
    Sp = (H + 2) * Wp              # padded flat spatial size
    m = Wp + 1                     # margin so every 3x3 tap is a contiguous slice
    L = Sp + 2 * m                 # wide buffer length (zero margins)
    taps = [(dy, dx) for dy in range(3) for dx in range(3)]

    def kernel(*refs):
        xs = refs[0:branches]                                # (1, Cmid, H*W) each
        wcs = refs[branches:2 * branches]                    # (Cmid, 9*Cmid) each
        bcs = refs[2 * branches:3 * branches]                # (Cmid, 1) each
        (mask_ref, w1_ref, b1_ref, w2t_ref, b2_ref,
         wb_ref, bb_ref, alpha_ref) = refs[3 * branches:3 * branches + 8]
        o_ref = refs[3 * branches + 8]                       # (1, Cout, Sp)
        xbig_ref, featbig_ref, patch_ref = refs[3 * branches + 9:]

        mask = mask_ref[...]                                 # (1, Sp) interior mask

        # Zero the wide buffers (borders + margins provide the conv zero halo).
        xbig_ref[...] = jnp.zeros((c_mid, L), jnp.float32)
        featbig_ref[...] = jnp.zeros((c_tot, L), jnp.float32)

        # ---- branch crosser convs, written straight into the "concat" buffer ----
        for i in range(branches):
            x = xs[i][0]                                     # (Cmid, H*W) lane-dense
            # Scatter image rows into the zero-padded wide buffer (in-kernel halo).
            for h in range(H):
                dst = m + (h + 1) * Wp + 1
                xbig_ref[:, dst:dst + W] = x[:, h * W:(h + 1) * W]
            # K-folded 3x3 conv: stack the 9 shifted taps along K, one MXU dot.
            for t, (dy, dx) in enumerate(taps):
                off = m + (dy - 1) * Wp + (dx - 1)
                patch_ref[t * c_mid:(t + 1) * c_mid, :] = xbig_ref[:, off:off + Sp]
            y = jnp.dot(wcs[i][...], patch_ref[0:9 * c_mid, :],
                        preferred_element_type=jnp.float32) + bcs[i][...]
            # Mask kills the garbage computed at halo positions -> clean zero ring.
            featbig_ref[i * c_mid:(i + 1) * c_mid, m:m + Sp] = y * mask

        # ---- SE channel attention: pooled-only pass, scale kept in registers ----
        feat = featbig_ref[...]                              # (Ctot, L), zeros outside
        pooled = jnp.sum(feat, axis=1, keepdims=True) * (1.0 / (H * W))   # (Ctot, 1)
        z = jnp.maximum(
            jnp.sum(w1_ref[...] * pooled, axis=0, keepdims=True) + b1_ref[...], 0.0)
        s = jax.nn.sigmoid(
            jnp.sum(w2t_ref[...] * z, axis=1, keepdims=True) + b2_ref[...])  # (Ctot,1)

        # ---- body conv with the SE per-channel scale folded into patch assembly ----
        for t, (dy, dx) in enumerate(taps):
            off = m + (dy - 1) * Wp + (dx - 1)
            patch_ref[t * c_tot:(t + 1) * c_tot, :] = featbig_ref[:, off:off + Sp] * s
        yb = jnp.dot(wb_ref[...], patch_ref[...],
                     preferred_element_type=jnp.float32) + bb_ref[...]     # (Cout, Sp)

        alpha = alpha_ref[0, 0]                              # PReLU slope (SMEM scalar)
        yb = jnp.where(yb >= 0, yb, alpha * yb)
        o_ref[...] = yb.reshape(1, c_out, Sp).astype(o_ref.dtype)

    return kernel


# ----------------------------------------------------------------------------
# MFA forward (thin JAX glue: resize + free reshapes + one fused pallas_call)
# ----------------------------------------------------------------------------
def mfa_forward(params, tensors_nchw, target_size):
    Ht, Wt = target_size
    branches = len(tensors_nchw)
    B = tensors_nchw[0].shape[0]
    c_mid = tensors_nchw[0].shape[1]
    c_tot = c_mid * branches
    c_out = params["body_w"].shape[0]
    c_red = params["att_w1"].shape[1]

    Wp = Wt + 2
    Sp = (Ht + 2) * Wp
    m = Wp + 1
    L = Sp + 2 * m
    HW = Ht * Wt

    # Branch resize stays in XLA (bilinear, half-pixel like F.interpolate default).
    # TODO(synk): match align_corners if the real InterpolateResize differs.
    xs = []
    for x in tensors_nchw:
        x = jax.image.resize(x, (x.shape[0], x.shape[1], Ht, Wt), method="bilinear")
        xs.append(x.reshape(B, c_mid, HW).astype(jnp.float32))   # free reshape

    # Weight layout prep (tiny, host/XLA side).
    wcs = [params["crosser_w"][i].transpose(0, 2, 3, 1).reshape(c_mid, 9 * c_mid)
           for i in range(branches)]
    bcs = [params["crosser_b"][i].reshape(c_mid, 1) for i in range(branches)]
    w1 = params["att_w1"]                                     # (Ctot, Cr)
    b1 = params["att_b1"].reshape(1, c_red)
    w2t = params["att_w2"].T                                  # (Ctot, Cr)
    b2 = params["att_b2"].reshape(c_tot, 1)
    wb = params["body_w"].transpose(0, 2, 3, 1).reshape(c_out, 9 * c_tot)
    bb = params["body_b"].reshape(c_out, 1)
    alpha = jnp.asarray(params["prelu_alpha"], jnp.float32).reshape(1, 1)

    # Interior mask on the padded grid (zeroes out halo garbage).
    mask = jnp.zeros((Ht + 2, Wp), jnp.float32).at[1:Ht + 1, 1:Wt + 1].set(1.0)
    mask = mask.reshape(1, Sp)

    kernel = _make_mfa_kernel(branches, c_mid, c_tot, c_out, c_red, Ht, Wt)

    in_specs = (
        [pl.BlockSpec((1, c_mid, HW), lambda b: (b, 0, 0)) for _ in range(branches)]
        + [pl.BlockSpec((c_mid, 9 * c_mid), lambda b: (0, 0)) for _ in range(branches)]
        + [pl.BlockSpec((c_mid, 1), lambda b: (0, 0)) for _ in range(branches)]
        + [
            pl.BlockSpec((1, Sp), lambda b: (0, 0)),
            pl.BlockSpec((c_tot, c_red), lambda b: (0, 0)),
            pl.BlockSpec((1, c_red), lambda b: (0, 0)),
            pl.BlockSpec((c_tot, c_red), lambda b: (0, 0)),
            pl.BlockSpec((c_tot, 1), lambda b: (0, 0)),
            pl.BlockSpec((c_out, 9 * c_tot), lambda b: (0, 0)),
            pl.BlockSpec((c_out, 1), lambda b: (0, 0)),
            pl.BlockSpec(memory_space=pltpu.MemorySpace.SMEM),
        ])

    out_wide = pl.pallas_call(
        kernel,
        out_shape=jax.ShapeDtypeStruct((B, c_out, Sp), jnp.float32),
        grid_spec=pltpu.PrefetchScalarGridSpec(
            num_scalar_prefetch=0,
            grid=(B,),
            in_specs=in_specs,
            out_specs=pl.BlockSpec((1, c_out, Sp), lambda b: (b, 0, 0)),
            scratch_shapes=[
                pltpu.VMEM((c_mid, L), jnp.float32),    # wide padded branch input
                pltpu.VMEM((c_tot, L), jnp.float32),    # wide padded concat feature
                pltpu.VMEM((9 * c_tot, Sp), jnp.float32),  # K-folded conv patch
            ]),
        compiler_params=pltpu.CompilerParams(
            dimension_semantics=("parallel",),
            vmem_limit_bytes=32 * 1024 * 1024),
    )(*(xs + wcs + bcs + [mask, w1, b1, w2t, b2, wb, bb, alpha]))

    # Strip the 1-pixel halo (cheap XLA slice) -> NCHW output, no transpose needed.
    out = out_wide.reshape(B, c_out, Ht + 2, Wp)[:, :, 1:Ht + 1, 1:Wt + 1]
    return out


# ----------------------------------------------------------------------------
# Pure-JAX reference (correctness check)
# ----------------------------------------------------------------------------
def _ref_conv3x3(x, w, b):
    y = jax.lax.conv_general_dilated(
        x, w, window_strides=(1, 1), padding="SAME",
        dimension_numbers=("NCHW", "OIHW", "NCHW"))
    return y + b.reshape(1, -1, 1, 1)


def mfa_reference(params, tensors_nchw, target_size):
    Ht, Wt = target_size
    feats = []
    for i, x in enumerate(tensors_nchw):
        x = jax.image.resize(x, (x.shape[0], x.shape[1], Ht, Wt), method="bilinear")
        feats.append(_ref_conv3x3(x, params["crosser_w"][i], params["crosser_b"][i]))
    f = jnp.concatenate(feats, axis=1)
    pooled = jnp.mean(f, axis=(2, 3))                                   # (B, Ctot)
    z = jnp.maximum(pooled @ params["att_w1"] + params["att_b1"], 0.0)
    s = jax.nn.sigmoid(z @ params["att_w2"] + params["att_b2"])
    f = f * s[:, :, None, None]
    y = _ref_conv3x3(f, params["body_w"], params["body_b"])
    y = jnp.where(y >= 0, y, params["prelu_alpha"] * y)
    return y


# ----------------------------------------------------------------------------
# Deterministic parameter construction + demo
# ----------------------------------------------------------------------------
def make_params(key, mid_channels, out_channels, branches, reduction=4):
    total = mid_channels * branches
    cr = max(total // reduction, 1)
    keys = jax.random.split(key, 8)
    scale = 0.1
    return {
        "crosser_w": [scale * jax.random.normal(
            jax.random.fold_in(keys[0], i), (mid_channels, mid_channels, 3, 3),
            jnp.float32) for i in range(branches)],
        "crosser_b": [scale * jax.random.normal(
            jax.random.fold_in(keys[1], i), (mid_channels,), jnp.float32)
            for i in range(branches)],
        "att_w1": scale * jax.random.normal(keys[2], (total, cr), jnp.float32),
        "att_b1": scale * jax.random.normal(keys[3], (cr,), jnp.float32),
        "att_w2": scale * jax.random.normal(keys[4], (cr, total), jnp.float32),
        "att_b2": scale * jax.random.normal(keys[5], (total,), jnp.float32),
        "body_w": scale * jax.random.normal(keys[6], (out_channels, total, 3, 3),
                                            jnp.float32),
        "body_b": scale * jax.random.normal(keys[7], (out_channels,), jnp.float32),
        "prelu_alpha": jnp.float32(0.25),  # nn.PReLU() default init
    }


if __name__ == "__main__":
    mid_channels, out_channels, branches = 4, 4, 2
    B, H, W = 2, 16, 16
    target_size = (H, W)

    key = jax.random.PRNGKey(0)
    k1, k2, kp = jax.random.split(key, 3)
    # Two branches at different scales (NCHW, like PyTorch).
    x1 = jax.random.normal(k1, (B, mid_channels, H // 2, W // 2), jnp.float32)
    x2 = jax.random.normal(k2, (B, mid_channels, H, W), jnp.float32)
    tensors = [x1, x2]

    params = make_params(kp, mid_channels, out_channels, branches)

    out = jax.block_until_ready(mfa_forward(params, tensors, target_size))
    assert out.shape == (B, out_channels, H, W), out.shape

    ref = jax.block_until_ready(mfa_reference(params, tensors, target_size))
    max_err = float(jnp.max(jnp.abs(out - ref)))
    assert jnp.allclose(out, ref, rtol=1e-3, atol=1e-3), max_err

    print("KERNEL_OK")
</pallas_src>

<mosaic_0001>
module attributes {stable_mosaic.version = 11 : i64} {
  func.func @kernel(%arg0: i32, %arg1: memref<1x4x256xf32, #tpu.memory_space<vmem>>, %arg2: memref<1x4x256xf32, #tpu.memory_space<vmem>>, %arg3: memref<4x36xf32, #tpu.memory_space<vmem>>, %arg4: memref<4x36xf32, #tpu.memory_space<vmem>>, %arg5: memref<4x1xf32, #tpu.memory_space<vmem>>, %arg6: memref<4x1xf32, #tpu.memory_space<vmem>>, %arg7: memref<1x324xf32, #tpu.memory_space<vmem>>, %arg8: memref<8x2xf32, #tpu.memory_space<vmem>>, %arg9: memref<1x2xf32, #tpu.memory_space<vmem>>, %arg10: memref<8x2xf32, #tpu.memory_space<vmem>>, %arg11: memref<8x1xf32, #tpu.memory_space<vmem>>, %arg12: memref<4x72xf32, #tpu.memory_space<vmem>>, %arg13: memref<4x1xf32, #tpu.memory_space<vmem>>, %arg14: memref<1x1xf32, #tpu.memory_space<smem>>, %arg15: memref<1x4x324xf32, #tpu.memory_space<vmem>>, %arg16: memref<4x362xf32, #tpu.memory_space<vmem>>, %arg17: memref<8x362xf32, #tpu.memory_space<vmem>>, %arg18: memref<72x324xf32, #tpu.memory_space<vmem>>) attributes {dimension_semantics = [#tpu.dimension_semantics<parallel>], iteration_bounds = array<i64: 2>, scalar_prefetch = 0 : i64, scratch_operands = 3 : i64, tpu.core_type = #tpu.core_type<tc>, window_params = [{transform_indices = @transform_0, window_bounds = array<i64: 1, 4, 256>}, {transform_indices = @transform_1, window_bounds = array<i64: 1, 4, 256>}, {pipeline_mode = #tpu.pipeline_mode<synchronous>, transform_indices = @transform_2, window_bounds = array<i64: 4, 36>}, {pipeline_mode = #tpu.pipeline_mode<synchronous>, transform_indices = @transform_3, window_bounds = array<i64: 4, 36>}, {pipeline_mode = #tpu.pipeline_mode<synchronous>, transform_indices = @transform_4, window_bounds = array<i64: 4, 1>}, {pipeline_mode = #tpu.pipeline_mode<synchronous>, transform_indices = @transform_5, window_bounds = array<i64: 4, 1>}, {pipeline_mode = #tpu.pipeline_mode<synchronous>, transform_indices = @transform_6, window_bounds = array<i64: 1, 324>}, {pipeline_mode = #tpu.pipeline_mode<synchronous>, transform_indices = @transform_7, window_bounds = array<i64: 8, 2>}, {pipeline_mode = #tpu.pipeline_mode<synchronous>, transform_indices = @transform_8, window_bounds = array<i64: 1, 2>}, {pipeline_mode = #tpu.pipeline_mode<synchronous>, transform_indices = @transform_9, window_bounds = array<i64: 8, 2>}, {pipeline_mode = #tpu.pipeline_mode<synchronous>, transform_indices = @transform_10, window_bounds = array<i64: 8, 1>}, {pipeline_mode = #tpu.pipeline_mode<synchronous>, transform_indices = @transform_11, window_bounds = array<i64: 4, 72>}, {pipeline_mode = #tpu.pipeline_mode<synchronous>, transform_indices = @transform_12, window_bounds = array<i64: 4, 1>}, {transform_indices = @transform_13, window_bounds = array<i64: 1, 1>}, {transform_indices = @transform_14, window_bounds = array<i64: 1, 4, 324>}]} {
    %c0 = arith.constant 0 : index
    %c0_0 = arith.constant 0 : index
    %0 = vector.load %arg7[%c0, %c0_0] : memref<1x324xf32, #tpu.memory_space<vmem>>, vector<1x324xf32>
    %cst = arith.constant 0.000000e+00 : f32
    %1 = vector.broadcast %cst : f32 to vector<4x362xf32>
    %c0_1 = arith.constant 0 : index
    %c0_2 = arith.constant 0 : index
    %2 = vector.load %arg16[%c0_1, %c0_2] : memref<4x362xf32, #tpu.memory_space<vmem>>, vector<4x362xf32>
    tpu.vector_store %arg16[%c0_1, %c0_2], %1 {strides = array<i32>} : memref<4x362xf32, #tpu.memory_space<vmem>>, vector<4x362xf32>,
    %cst_3 = arith.constant 0.000000e+00 : f32
    %3 = vector.broadcast %cst_3 : f32 to vector<8x362xf32>
    %c0_4 = arith.constant 0 : index
    %c0_5 = arith.constant 0 : index
    %4 = vector.load %arg17[%c0_4, %c0_5] : memref<8x362xf32, #tpu.memory_space<vmem>>, vector<8x362xf32>
    tpu.vector_store %arg17[%c0_4, %c0_5], %3 {strides = array<i32>} : memref<8x362xf32, #tpu.memory_space<vmem>>, vector<8x362xf32>,
    %c0_6 = arith.constant 0 : index
    %c0_7 = arith.constant 0 : index
    %c0_8 = arith.constant 0 : index
    %5 = vector.load %arg1[%c0_6, %c0_7, %c0_8] : memref<1x4x256xf32, #tpu.memory_space<vmem>>, vector<1x4x256xf32>
    %6 = vector.shape_cast %5 : vector<1x4x256xf32> to vector<4x256xf32>
    %7 = vector.extract_strided_slice %6 {offsets = [0, 0], sizes = [4, 16], strides = [1, 1]} : vector<4x256xf32> to vector<4x16xf32>
    %c0_9 = arith.constant 0 : index
    %c38 = arith.constant 38 : index
    %8 = vector.load %arg16[%c0_9, %c38] : memref<4x362xf32, #tpu.memory_space<vmem>>, vector<4x16xf32>
    tpu.vector_store %arg16[%c0_9, %c38], %7 {strides = array<i32>} : memref<4x362xf32, #tpu.memory_space<vmem>>, vector<4x16xf32>,
    %9 = vector.extract_strided_slice %6 {offsets = [0, 16], sizes = [4, 16], strides = [1, 1]} : vector<4x256xf32> to vector<4x16xf32>
    %c0_10 = arith.constant 0 : index
    %c56 = arith.constant 56 : index
    %10 = vector.load %arg16[%c0_10, %c56] : memref<4x362xf32, #tpu.memory_space<vmem>>, vector<4x16xf32>
    tpu.vector_store %arg16[%c0_10, %c56], %9 {strides = array<i32>} : memref<4x362xf32, #tpu.memory_space<vmem>>, vector<4x16xf32>,
    %11 = vector.extract_strided_slice %6 {offsets = [0, 32], sizes = [4, 16], strides = [1, 1]} : vector<4x256xf32> to vector<4x16xf32>
    %c0_11 = arith.constant 0 : index
    %c74 = arith.constant 74 : index
    %12 = vector.load %arg16[%c0_11, %c74] : memref<4x362xf32, #tpu.memory_space<vmem>>, vector<4x16xf32>
    tpu.vector_store %arg16[%c0_11, %c74], %11 {strides = array<i32>} : memref<4x362xf32, #tpu.memory_space<vmem>>, vector<4x16xf32>,
    %13 = vector.extract_strided_slice %6 {offsets = [0, 48], sizes = [4, 16], strides = [1, 1]} : vector<4x256xf32> to vector<4x16xf32>
    %c0_12 = arith.constant 0 : index
    %c92 = arith.constant 92 : index
    %14 = vector.load %arg16[%c0_12, %c92] : memref<4x362xf32, #tpu.memory_space<vmem>>, vector<4x16xf32>
    tpu.vector_store %arg16[%c0_12, %c92], %13 {strides = array<i32>} : memref<4x362xf32, #tpu.memory_space<vmem>>, vector<4x16xf32>,
    %15 = vector.extract_strided_slice %6 {offsets = [0, 64], sizes = [4, 16], strides = [1, 1]} : vector<4x256xf32> to vector<4x16xf32>
    %c0_13 = arith.constant 0 : index
    %c110 = arith.constant 110 : index
    %16 = vector.load %arg16[%c0_13, %c110] : memref<4x362xf32, #tpu.memory_space<vmem>>, vector<4x16xf32>
    tpu.vector_store %arg16[%c0_13, %c110], %15 {strides = array<i32>} : memref<4x362xf32, #tpu.memory_space<vmem>>, vector<4x16xf32>,
    %17 = vector.extract_strided_slice %6 {offsets = [0, 80], sizes = [4, 16], strides = [1, 1]} : vector<4x256xf32> to vector<4x16xf32>
    %c0_14 = arith.constant 0 : index
    %c128 = arith.constant 128 : index
    %18 = vector.load %arg16[%c0_14, %c128] : memref<4x362xf32, #tpu.memory_space<vmem>>, vector<4x16xf32>
    tpu.vector_store %arg16[%c0_14, %c128], %17 {strides = array<i32>} : memref<4x362xf32, #tpu.memory_space<vmem>>, vector<4x16xf32>,
    %19 = vector.extract_strided_slice %6 {offsets = [0, 96], sizes = [4, 16], strides = [1, 1]} : vector<4x256xf32> to vector<4x16xf32>
    %c0_15 = arith.constant 0 : index
    %c146 = arith.constant 146 : index
    %20 = vector.load %arg16[%c0_15, %c146] : memref<4x362xf32, #tpu.memory_space<vmem>>, vector<4x16xf32>
    tpu.vector_store %arg16[%c0_15, %c146], %19 {strides = array<i32>} : memref<4x362xf32, #tpu.memory_space<vmem>>, vector<4x16xf32>,
    %21 = vector.extract_strided_slice %6 {offsets = [0, 112], sizes = [4, 16], strides = [1, 1]} : vector<4x256xf32> to vector<4x16xf32>
    %c0_16 = arith.constant 0 : index
    %c164 = arith.constant 164 : index
    %22 = vector.load %arg16[%c0_16, %c164] : memref<4x362xf32, #tpu.memory_space<vmem>>, vector<4x16xf32>
    tpu.vector_store %arg16[%c0_16, %c164], %21 {strides = array<i32>} : memref<4x362xf32, #tpu.memory_space<vmem>>, vector<4x16xf32>,
    %23 = vector.extract_strided_slice %6 {offsets = [0, 128], sizes = [4, 16], strides = [1, 1]} : vector<4x256xf32> to vector<4x16xf32>
    %c0_17 = arith.constant 0 : index
    %c182 = arith.constant 182 : index
    %24 = vector.load %arg16[%c0_17, %c182] : memref<4x362xf32, #tpu.memory_space<vmem>>, vector<4x16xf32>
    tpu.vector_store %arg16[%c0_17, %c182], %23 {strides = array<i32>} : memref<4x362xf32, #tpu.memory_space<vmem>>, vector<4x16xf32>,
    %25 = vector.extract_strided_slice %6 {offsets = [0, 144], sizes = [4, 16], strides = [1, 1]} : vector<4x256xf32> to vector<4x16xf32>
    %c0_18 = arith.constant 0 : index
    %c200 = arith.constant 200 : index
    %26 = vector.load %arg16[%c0_18, %c200] : memref<4x362xf32, #tpu.memory_space<vmem>>, vector<4x16xf32>
    tpu.vector_store %arg16[%c0_18, %c200], %25 {strides = array<i32>} : memref<4x362xf32, #tpu.memory_space<vmem>>, vector<4x16xf32>,
    %27 = vector.extract_strided_slice %6 {offsets = [0, 160], sizes = [4, 16], strides = [1, 1]} : vector<4x256xf32> to vector<4x16xf32>
    %c0_19 = arith.constant 0 : index
    %c218 = arith.constant 218 : index
    %28 = vector.load %arg16[%c0_19, %c218] : memref<4x362xf32, #tpu.memory_space<vmem>>, vector<4x16xf32>
    tpu.vector_store %arg16[%c0_19, %c218], %27 {strides = array<i32>} : memref<4x362xf32, #tpu.memory_space<vmem>>, vector<4x16xf32>,
    %29 = vector.extract_strided_slice %6 {offsets = [0, 176], sizes = [4, 16], strides = [1, 1]} : vector<4x256xf32> to vector<4x16xf32>
    %c0_20 = arith.constant 0 : index
    %c236 = arith.constant 236 : index
    %30 = vector.load %arg16[%c0_20, %c236] : memref<4x362xf32, #tpu.memory_space<vmem>>, vector<4x16xf32>
    tpu.vector_store %arg16[%c0_20, %c236], %29 {strides = array<i32>} : memref<4x362xf32, #tpu.memory_space<vmem>>, vector<4x16xf32>,
    %31 = vector.extract_strided_slice %6 {offsets = [0, 192], sizes = [4, 16], strides = [1, 1]} : vector<4x256xf32> to vector<4x16xf32>
    %c0_21 = arith.constant 0 : index
    %c254 = arith.constant 254 : index
    %32 = vector.load %arg16[%c0_21, %c254] : memref<4x362xf32, #tpu.memory_space<vmem>>, vector<4x16xf32>
    tpu.vector_store %arg16[%c0_21, %c254], %31 {strides = array<i32>} : memref<4x362xf32, #tpu.memory_space<vmem>>, vector<4x16xf32>,
    %33 = vector.extract_strided_slice %6 {offsets = [0, 208], sizes = [4, 16], strides = [1, 1]} : vector<4x256xf32> to vector<4x16xf32>
    %c0_22 = arith.constant 0 : index
    %c272 = arith.constant 272 : index
    %34 = vector.load %arg16[%c0_22, %c272] : memref<4x362xf32, #tpu.memory_space<vmem>>, vector<4x16xf32>
    tpu.vector_store %arg16[%c0_22, %c272], %33 {strides = array<i32>} : memref<4x362xf32, #tpu.memory_space<vmem>>, vector<4x16xf32>,
    %35 = vector.extract_strided_slice %6 {offsets = [0, 224], sizes = [4, 16], strides = [1, 1]} : vector<4x256xf32> to vector<4x16xf32>
    %c0_23 = arith.constant 0 : index
    %c290 = arith.constant 290 : index
    %36 = vector.load %arg16[%c0_23, %c290] : memref<4x362xf32, #tpu.memory_space<vmem>>, vector<4x16xf32>
    tpu.vector_store %arg16[%c0_23, %c290], %35 {strides = array<i32>} : memref<4x362xf32, #tpu.memory_space<vmem>>, vector<4x16xf32>,
    %37 = vector.extract_strided_slice %6 {offsets = [0, 240], sizes = [4, 16], strides = [1, 1]} : vector<4x256xf32> to vector<4x16xf32>
    %c0_24 = arith.constant 0 : index
    %c308 = arith.constant 308 : index
    %38 = vector.load %arg16[%c0_24, %c308] : memref<4x362xf32, #tpu.memory_space<vmem>>, vector<4x16xf32>
    tpu.vector_store %arg16[%c0_24, %c308], %37 {strides = array<i32>} : memref<4x362xf32, #tpu.memory_space<vmem>>, vector<4x16xf32>,
    %c0_25 = arith.constant 0 : index
    %c0_26 = arith.constant 0 : index
    %39 = vector.load %arg16[%c0_25, %c0_26] : memref<4x362xf32, #tpu.memory_space<vmem>>, vector<4x324xf32>
    %c0_27 = arith.constant 0 : index
    %c0_28 = arith.constant 0 : index
    %40 = vector.load %arg18[%c0_27, %c0_28] : memref<72x324xf32, #tpu.memory_space<vmem>>, vector<4x324xf32>
    tpu.vector_store %arg18[%c0_27, %c0_28], %39 {strides = array<i32>} : memref<72x324xf32, #tpu.memory_space<vmem>>, vector<4x324xf32>,
    %c0_29 = arith.constant 0 : index
    %c1 = arith.constant 1 : index
    %41 = vector.load %arg16[%c0_29, %c1] : memref<4x362xf32, #tpu.memory_space<vmem>>, vector<4x324xf32>
    %c4 = arith.constant 4 : index
    %c0_30 = arith.constant 0 : index
    %42 = vector.load %arg18[%c4, %c0_30] : memref<72x324xf32, #tpu.memory_space<vmem>>, vector<4x324xf32>
    tpu.vector_store %arg18[%c4, %c0_30], %41 {strides = array<i32>} : memref<72x324xf32, #tpu.memory_space<vmem>>, vector<4x324xf32>,
    %c0_31 = arith.constant 0 : index
    %c2 = arith.constant 2 : index
    %43 = vector.load %arg16[%c0_31, %c2] : memref<4x362xf32, #tpu.memory_space<vmem>>, vector<4x324xf32>
    %c8 = arith.constant 8 : index
    %c0_32 = arith.constant 0 : index
    %44 = vector.load %arg18[%c8, %c0_32] : memref<72x324xf32, #tpu.memory_space<vmem>>, vector<4x324xf32>
    tpu.vector_store %arg18[%c8, %c0_32], %43 {strides = array<i32>} : memref<72x324xf32, #tpu.memory_space<vmem>>, vector<4x324xf32>,
    %c0_33 = arith.constant 0 : index
    %c18 = arith.constant 18 : index
    %45 = vector.load %arg16[%c0_33, %c18] : memref<4x362xf32, #tpu.memory_space<vmem>>, vector<4x324xf32>
    %c12 = arith.constant 12 : index
    %c0_34 = arith.constant 0 : index
    %46 = vector.load %arg18[%c12, %c0_34] : memref<72x324xf32, #tpu.memory_space<vmem>>, vector<4x324xf32>
    tpu.vector_store %arg18[%c12, %c0_34], %45 {strides = array<i32>} : memref<72x324xf32, #tpu.memory_space<vmem>>, vector<4x324xf32>,
    %c0_35 = arith.constant 0 : index
    %c19 = arith.constant 19 : index
    %47 = vector.load %arg16[%c0_35, %c19] : memref<4x362xf32, #tpu.memory_space<vmem>>, vector<4x324xf32>
    %c16 = arith.constant 16 : index
    %c0_36 = arith.constant 0 : index
    %48 = vector.load %arg18[%c16, %c0_36] : memref<72x324xf32, #tpu.memory_space<vmem>>, vector<4x324xf32>
    tpu.vector_store %arg18[%c16, %c0_36], %47 {strides = array<i32>} : memref<72x324xf32, #tpu.memory_space<vmem>>, vector<4x324xf32>,
    %c0_37 = arith.constant 0 : index
    %c20 = arith.constant 20 : index
    %49 = vector.load %arg16[%c0_37, %c20] : memref<4x362xf32, #tpu.memory_space<vmem>>, vector<4x324xf32>
    %c20_38 = arith.constant 20 : index
    %c0_39 = arith.constant 0 : index
    %50 = vector.load %arg18[%c20_38, %c0_39] : memref<72x324xf32, #tpu.memory_space<vmem>>, vector<4x324xf32>
    tpu.vector_store %arg18[%c20_38, %c0_39], %49 {strides = array<i32>} : memref<72x324xf32, #tpu.memory_space<vmem>>, vector<4x324xf32>,
    %c0_40 = arith.constant 0 : index
    %c36 = arith.constant 36 : index
    %51 = vector.load %arg16[%c0_40, %c36] : memref<4x362xf32, #tpu.memory_space<vmem>>, vector<4x324xf32>
    %c24 = arith.constant 24 : index
    %c0_41 = arith.constant 0 : index
    %52 = vector.load %arg18[%c24, %c0_41] : memref<72x324xf32, #tpu.memory_space<vmem>>, vector<4x324xf32>
    tpu.vector_store %arg18[%c24, %c0_41], %51 {strides = array<i32>} : memref<72x324xf32, #tpu.memory_space<vmem>>, vector<4x324xf32>,
    %c0_42 = arith.constant 0 : index
    %c37 = arith.constant 37 : index
    %53 = vector.load %arg16[%c0_42, %c37] : memref<4x362xf32, #tpu.memory_space<vmem>>, vector<4x324xf32>
    %c28 = arith.constant 28 : index
    %c0_43 = arith.constant 0 : index
    %54 = vector.load %arg18[%c28, %c0_43] : memref<72x324xf32, #tpu.memory_space<vmem>>, vector<4x324xf32>
    tpu.vector_store %arg18[%c28, %c0_43], %53 {strides = array<i32>} : memref<72x324xf32, #tpu.memory_space<vmem>>, vector<4x324xf32>,
    %c0_44 = arith.constant 0 : index
    %c38_45 = arith.constant 38 : index
    %55 = vector.load %arg16[%c0_44, %c38_45] : memref<4x362xf32, #tpu.memory_space<vmem>>, vector<4x324xf32>
    %c32 = arith.constant 32 : index
    %c0_46 = arith.constant 0 : index
    %56 = vector.load %arg18[%c32, %c0_46] : memref<72x324xf32, #tpu.memory_space<vmem>>, vector<4x324xf32>
    tpu.vector_store %arg18[%c32, %c0_46], %55 {strides = array<i32>} : memref<72x324xf32, #tpu.memory_space<vmem>>, vector<4x324xf32>,
    %c0_47 = arith.constant 0 : index
    %c0_48 = arith.constant 0 : index
    %57 = vector.load %arg3[%c0_47, %c0_48] : memref<4x36xf32, #tpu.memory_space<vmem>>, vector<4x36xf32>
    %c0_49 = arith.constant 0 : index
    %c0_50 = arith.constant 0 : index
    %58 = vector.load %arg18[%c0_49, %c0_50] : memref<72x324xf32, #tpu.memory_space<vmem>>, vector<36x324xf32>
    %cst_51 = arith.constant dense<0.000000e+00> : vector<4x324xf32>
    %59 = tpu.matmul %57, %58, %cst_51 {dimension_numbers = #tpu.dot_dimension_numbers<[1], [0], [0], [1], [0, 0, 1, 1], [], []>} : vector<4x36xf32>, vector<36x324xf32>, vector<4x324xf32> -> vector<4x324xf32>
    %c0_52 = arith.constant 0 : index
    %c0_53 = arith.constant 0 : index
    %60 = vector.load %arg5[%c0_52, %c0_53] : memref<4x1xf32, #tpu.memory_space<vmem>>, vector<4x1xf32>
    %61 = vector.broadcast %60 : vector<4x1xf32> to vector<4x324xf32>
    %62 = arith.addf %59, %61 : vector<4x324xf32>
    %63 = vector.broadcast %0 : vector<1x324xf32> to vector<4x324xf32>
    %64 = arith.mulf %62, %63 : vector<4x324xf32>
    %c0_54 = arith.constant 0 : index
    %c19_55 = arith.constant 19 : index
    %65 = vector.load %arg17[%c0_54, %c19_55] : memref<8x362xf32, #tpu.memory_space<vmem>>, vector<4x324xf32>
    tpu.vector_store %arg17[%c0_54, %c19_55], %64 {strides = array<i32>} : memref<8x362xf32, #tpu.memory_space<vmem>>, vector<4x324xf32>,
    %c0_56 = arith.constant 0 : index
    %c0_57 = arith.constant 0 : index
    %c0_58 = arith.constant 0 : index
    %66 = vector.load %arg2[%c0_56, %c0_57, %c0_58] : memref<1x4x256xf32, #tpu.memory_space<vmem>>, vector<1x4x256xf32>
    %67 = vector.shape_cast %66 : vector<1x4x256xf32> to vector<4x256xf32>
    %68 = vector.extract_strided_slice %67 {offsets = [0, 0], sizes = [4, 16], strides = [1, 1]} : vector<4x256xf32> to vector<4x16xf32>
    %c0_59 = arith.constant 0 : index
    %c38_60 = arith.constant 38 : index
    %69 = vector.load %arg16[%c0_59, %c38_60] : memref<4x362xf32, #tpu.memory_space<vmem>>, vector<4x16xf32>
    tpu.vector_store %arg16[%c0_59, %c38_60], %68 {strides = array<i32>} : memref<4x362xf32, #tpu.memory_space<vmem>>, vector<4x16xf32>,
    %70 = vector.extract_strided_slice %67 {offsets = [0, 16], sizes = [4, 16], strides = [1, 1]} : vector<4x256xf32> to vector<4x16xf32>
    %c0_61 = arith.constant 0 : index
    %c56_62 = arith.constant 56 : index
    %71 = vector.load %arg16[%c0_61, %c56_62] : memref<4x362xf32, #tpu.memory_space<vmem>>, vector<4x16xf32>
    tpu.vector_store %arg16[%c0_61, %c56_62], %70 {strides = array<i32>} : memref<4x362xf32, #tpu.memory_space<vmem>>, vector<4x16xf32>,
    %72 = vector.extract_strided_slice %67 {offsets = [0, 32], sizes = [4, 16], strides = [1, 1]} : vector<4x256xf32> to vector<4x16xf32>
    %c0_63 = arith.constant 0 : index
    %c74_64 = arith.constant 74 : index
    %73 = vector.load %arg16[%c0_63, %c74_64] : memref<4x362xf32, #tpu.memory_space<vmem>>, vector<4x16xf32>
    tpu.vector_store %arg16[%c0_63, %c74_64], %72 {strides = array<i32>} : memref<4x362xf32, #tpu.memory_space<vmem>>, vector<4x16xf32>,
    %74 = vector.extract_strided_slice %67 {offsets = [0, 48], sizes = [4, 16], strides = [1, 1]} : vector<4x256xf32> to vector<4x16xf32>
    %c0_65 = arith.constant 0 : index
    %c92_66 = arith.constant 92 : index
    %75 = vector.load %arg16[%c0_65, %c92_66] : memref<4x362xf32, #tpu.memory_space<vmem>>, vector<4x16xf32>
    tpu.vector_store %arg16[%c0_65, %c92_66], %74 {strides = array<i32>} : memref<4x362xf32, #tpu.memory_space<vmem>>, vector<4x16xf32>,
    %76 = vector.extract_strided_slice %67 {offsets = [0, 64], sizes = [4, 16], strides = [1, 1]} : vector<4x256xf32> to vector<4x16xf32>
    %c0_67 = arith.constant 0 : index
    %c110_68 = arith.constant 110 : index
    %77 = vector.load %arg16[%c0_67, %c110_68] : memref<4x362xf32, #tpu.memory_space<vmem>>, vector<4x16xf32>
    tpu.vector_store %arg16[%c0_67, %c110_68], %76 {strides = array<i32>} : memref<4x362xf32, #tpu.memory_space<vmem>>, vector<4x16xf32>,
    %78 = vector.extract_strided_slice %67 {offsets = [0, 80], sizes = [4, 16], strides = [1, 1]} : vector<4x256xf32> to vector<4x16xf32>
    %c0_69 = arith.constant 0 : index
    %c128_70 = arith.constant 128 : index
    %79 = vector.load %arg16[%c0_69, %c128_70] : memref<4x362xf32, #tpu.memory_space<vmem>>, vector<4x16xf32>
    tpu.vector_store %arg16[%c0_69, %c128_70], %78 {strides = array<i32>} : memref<4x362xf32, #tpu.memory_space<vmem>>, vector<4x16xf32>,
    %80 = vector.extract_strided_slice %67 {offsets = [0, 96], sizes = [4, 16], strides = [1, 1]} : vector<4x256xf32> to vector<4x16xf32>
    %c0_71 = arith.constant 0 : index
    %c146_72 = arith.constant 146 : index
    %81 = vector.load %arg16[%c0_71, %c146_72] : memref<4x362xf32, #tpu.memory_space<vmem>>, vector<4x16xf32>
    tpu.vector_store %arg16[%c0_71, %c146_72], %80 {strides = array<i32>} : memref<4x362xf32, #tpu.memory_space<vmem>>, vector<4x16xf32>,
    %82 = vector.extract_strided_slice %67 {offsets = [0, 112], sizes = [4, 16], strides = [1, 1]} : vector<4x256xf32> to vector<4x16xf32>
    %c0_73 = arith.constant 0 : index
    %c164_74 = arith.constant 164 : index
    %83 = vector.load %arg16[%c0_73, %c164_74] : memref<4x362xf32, #tpu.memory_space<vmem>>, vector<4x16xf32>
    tpu.vector_store %arg16[%c0_73, %c164_74], %82 {strides = array<i32>} : memref<4x362xf32, #tpu.memory_space<vmem>>, vector<4x16xf32>,
    %84 = vector.extract_strided_slice %67 {offsets = [0, 128], sizes = [4, 16], strides = [1, 1]} : vector<4x256xf32> to vector<4x16xf32>
    %c0_75 = arith.constant 0 : index
    %c182_76 = arith.constant 182 : index
    %85 = vector.load %arg16[%c0_75, %c182_76] : memref<4x362xf32, #tpu.memory_space<vmem>>, vector<4x16xf32>
    tpu.vector_store %arg16[%c0_75, %c182_76], %84 {strides = array<i32>} : memref<4x362xf32, #tpu.memory_space<vmem>>, vector<4x16xf32>,
    %86 = vector.extract_strided_slice %67 {offsets = [0, 144], sizes = [4, 16], strides = [1, 1]} : vector<4x256xf32> to vector<4x16xf32>
    %c0_77 = arith.constant 0 : index
    %c200_78 = arith.constant 200 : index
    %87 = vector.load %arg16[%c0_77, %c200_78] : memref<4x362xf32, #tpu.memory_space<vmem>>, vector<4x16xf32>
    tpu.vector_store %arg16[%c0_77, %c200_78], %86 {strides = array<i32>} : memref<4x362xf32, #tpu.memory_space<vmem>>, vector<4x16xf32>,
    %88 = vector.extract_strided_slice %67 {offsets = [0, 160], sizes = [4, 16], strides = [1, 1]} : vector<4x256xf32> to vector<4x16xf32>
    %c0_79 = arith.constant 0 : index
    %c218_80 = arith.constant 218 : index
    %89 = vector.load %arg16[%c0_79, %c218_80] : memref<4x362xf32, #tpu.memory_space<vmem>>, vector<4x16xf32>
    tpu.vector_store %arg16[%c0_79, %c218_80], %88 {strides = array<i32>} : memref<4x362xf32, #tpu.memory_space<vmem>>, vector<4x16xf32>,
    %90 = vector.extract_strided_slice %67 {offsets = [0, 176], sizes = [4, 16], strides = [1, 1]} : vector<4x256xf32> to vector<4x16xf32>
    %c0_81 = arith.constant 0 : index
    %c236_82 = arith.constant 236 : index
    %91 = vector.load %arg16[%c0_81, %c236_82] : memref<4x362xf32, #tpu.memory_space<vmem>>, vector<4x16xf32>
    tpu.vector_store %arg16[%c0_81, %c236_82], %90 {strides = array<i32>} : memref<4x362xf32, #tpu.memory_space<vmem>>, vector<4x16xf32>,
    %92 = vector.extract_strided_slice %67 {offsets = [0, 192], sizes = [4, 16], strides = [1, 1]} : vector<4x256xf32> to vector<4x16xf32>
    %c0_83 = arith.constant 0 : index
    %c254_84 = arith.constant 254 : index
    %93 = vector.load %arg16[%c0_83, %c254_84] : memref<4x362xf32, #tpu.memory_space<vmem>>, vector<4x16xf32>
    tpu.vector_store %arg16[%c0_83, %c254_84], %92 {strides = array<i32>} : memref<4x362xf32, #tpu.memory_space<vmem>>, vector<4x16xf32>,
    %94 = vector.extract_strided_slice %67 {offsets = [0, 208], sizes = [4, 16], strides = [1, 1]} : vector<4x256xf32> to vector<4x16xf32>
    %c0_85 = arith.constant 0 : index
    %c272_86 = arith.constant 272 : index
    %95 = vector.load %arg16[%c0_85, %c272_86] : memref<4x362xf32, #tpu.memory_space<vmem>>, vector<4x16xf32>
    tpu.vector_store %arg16[%c0_85, %c272_86], %94 {strides = array<i32>} : memref<4x362xf32, #tpu.memory_space<vmem>>, vector<4x16xf32>,
    %96 = vector.extract_strided_slice %67 {offsets = [0, 224], sizes = [4, 16], strides = [1, 1]} : vector<4x256xf32> to vector<4x16xf32>
    %c0_87 = arith.constant 0 : index
    %c290_88 = arith.constant 290 : index
    %97 = vector.load %arg16[%c0_87, %c290_88] : memref<4x362xf32, #tpu.memory_space<vmem>>, vector<4x16xf32>
    tpu.vector_store %arg16[%c0_87, %c290_88], %96 {strides = array<i32>} : memref<4x362xf32, #tpu.memory_space<vmem>>, vector<4x16xf32>,
    %98 = vector.extract_strided_slice %67 {offsets = [0, 240], sizes = [4, 16], strides = [1, 1]} : vector<4x256xf32> to vector<4x16xf32>
    %c0_89 = arith.constant 0 : index
    %c308_90 = arith.constant 308 : index
    %99 = vector.load %arg16[%c0_89, %c308_90] : memref<4x362xf32, #tpu.memory_space<vmem>>, vector<4x16xf32>
    tpu.vector_store %arg16[%c0_89, %c308_90], %98 {strides = array<i32>} : memref<4x362xf32, #tpu.memory_space<vmem>>, vector<4x16xf32>,
    %c0_91 = arith.constant 0 : index
    %c0_92 = arith.constant 0 : index
    %100 = vector.load %arg16[%c0_91, %c0_92] : memref<4x362xf32, #tpu.memory_space<vmem>>, vector<4x324xf32>
    %c0_93 = arith.constant 0 : index
    %c0_94 = arith.constant 0 : index
    %101 = vector.load %arg18[%c0_93, %c0_94] : memref<72x324xf32, #tpu.memory_space<vmem>>, vector<4x324xf32>
    tpu.vector_store %arg18[%c0_93, %c0_94], %100 {strides = array<i32>} : memref<72x324xf32, #tpu.memory_space<vmem>>, vector<4x324xf32>,
    %c0_95 = arith.constant 0 : index
    %c1_96 = arith.constant 1 : index
    %102 = vector.load %arg16[%c0_95, %c1_96] : memref<4x362xf32, #tpu.memory_space<vmem>>, vector<4x324xf32>
    %c4_97 = arith.constant 4 : index
    %c0_98 = arith.constant 0 : index
    %103 = vector.load %arg18[%c4_97, %c0_98] : memref<72x324xf32, #tpu.memory_space<vmem>>, vector<4x324xf32>
    tpu.vector_store %arg18[%c4_97, %c0_98], %102 {strides = array<i32>} : memref<72x324xf32, #tpu.memory_space<vmem>>, vector<4x324xf32>,
    %c0_99 = arith.constant 0 : index
    %c2_100 = arith.constant 2 : index
    %104 = vector.load %arg16[%c0_99, %c2_100] : memref<4x362xf32, #tpu.memory_space<vmem>>, vector<4x324xf32>
    %c8_101 = arith.constant 8 : index
    %c0_102 = arith.constant 0 : index
    %105 = vector.load %arg18[%c8_101, %c0_102] : memref<72x324xf32, #tpu.memory_space<vmem>>, vector<4x324xf32>
    tpu.vector_store %arg18[%c8_101, %c0_102], %104 {strides = array<i32>} : memref<72x324xf32, #tpu.memory_space<vmem>>, vector<4x324xf32>,
    %c0_103 = arith.constant 0 : index
    %c18_104 = arith.constant 18 : index
    %106 = vector.load %arg16[%c0_103, %c18_104] : memref<4x362xf32, #tpu.memory_space<vmem>>, vector<4x324xf32>
    %c12_105 = arith.constant 12 : index
    %c0_106 = arith.constant 0 : index
    %107 = vector.load %arg18[%c12_105, %c0_106] : memref<72x324xf32, #tpu.memory_space<vmem>>, vector<4x324xf32>
    tpu.vector_store %arg18[%c12_105, %c0_106], %106 {strides = array<i32>} : memref<72x324xf32, #tpu.memory_space<vmem>>, vector<4x324xf32>,
    %c0_107 = arith.constant 0 : index
    %c19_108 = arith.constant 19 : index
    %108 = vector.load %arg16[%c0_107, %c19_108] : memref<4x362xf32, #tpu.memory_space<vmem>>, vector<4x324xf32>
    %c16_109 = arith.constant 16 : index
    %c0_110 = arith.constant 0 : index
    %109 = vector.load %arg18[%c16_109, %c0_110] : memref<72x324xf32, #tpu.memory_space<vmem>>, vector<4x324xf32>
    tpu.vector_store %arg18[%c16_109, %c0_110], %108 {strides = array<i32>} : memref<72x324xf32, #tpu.memory_space<vmem>>, vector<4x324xf32>,
    %c0_111 = arith.constant 0 : index
    %c20_112 = arith.constant 20 : index
    %110 = vector.load %arg16[%c0_111, %c20_112] : memref<4x362xf32, #tpu.memory_space<vmem>>, vector<4x324xf32>
    %c20_113 = arith.constant 20 : index
    %c0_114 = arith.constant 0 : index
    %111 = vector.load %arg18[%c20_113, %c0_114] : memref<72x324xf32, #tpu.memory_space<vmem>>, vector<4x324xf32>
    tpu.vector_store %arg18[%c20_113, %c0_114], %110 {strides = array<i32>} : memref<72x324xf32, #tpu.memory_space<vmem>>, vector<4x324xf32>,
    %c0_115 = arith.constant 0 : index
    %c36_116 = arith.constant 36 : index
    %112 = vector.load %arg16[%c0_115, %c36_116] : memref<4x362xf32, #tpu.memory_space<vmem>>, vector<4x324xf32>
    %c24_117 = arith.constant 24 : index
    %c0_118 = arith.constant 0 : index
    %113 = vector.load %arg18[%c24_117, %c0_118] : memref<72x324xf32, #tpu.memory_space<vmem>>, vector<4x324xf32>
    tpu.vector_store %arg18[%c24_117, %c0_118], %112 {strides = array<i32>} : memref<72x324xf32, #tpu.memory_space<vmem>>, vector<4x324xf32>,
    %c0_119 = arith.constant 0 : index
    %c37_120 = arith.constant 37 : index
    %114 = vector.load %arg16[%c0_119, %c37_120] : memref<4x362xf32, #tpu.memory_space<vmem>>, vector<4x324xf32>
    %c28_121 = arith.constant 28 : index
    %c0_122 = arith.constant 0 : index
    %115 = vector.load %arg18[%c28_121, %c0_122] : memref<72x324xf32, #tpu.memory_space<vmem>>, vector<4x324xf32>
    tpu.vector_store %arg18[%c28_121, %c0_122], %114 {strides = array<i32>} : memref<72x324xf32, #tpu.memory_space<vmem>>, vector<4x324xf32>,
    %c0_123 = arith.constant 0 : index
    %c38_124 = arith.constant 38 : index
    %116 = vector.load %arg16[%c0_123, %c38_124] : memref<4x362xf32, #tpu.memory_space<vmem>>, vector<4x324xf32>
    %c32_125 = arith.constant 32 : index
    %c0_126 = arith.constant 0 : index
    %117 = vector.load %arg18[%c32_125, %c0_126] : memref<72x324xf32, #tpu.memory_space<vmem>>, vector<4x324xf32>
    tpu.vector_store %arg18[%c32_125, %c0_126], %116 {strides = array<i32>} : memref<72x324xf32, #tpu.memory_space<vmem>>, vector<4x324xf32>,
    %c0_127 = arith.constant 0 : index
    %c0_128 = arith.constant 0 : index
    %118 = vector.load %arg4[%c0_127, %c0_128] : memref<4x36xf32, #tpu.memory_space<vmem>>, vector<4x36xf32>
    %c0_129 = arith.constant 0 : index
    %c0_130 = arith.constant 0 : index
    %119 = vector.load %arg18[%c0_129, %c0_130] : memref<72x324xf32, #tpu.memory_space<vmem>>, vector<36x324xf32>
    %cst_131 = arith.constant dense<0.000000e+00> : vector<4x324xf32>
    %120 = tpu.matmul %118, %119, %cst_131 {dimension_numbers = #tpu.dot_dimension_numbers<[1], [0], [0], [1], [0, 0, 1, 1], [], []>} : vector<4x36xf32>, vector<36x324xf32>, vector<4x324xf32> -> vector<4x324xf32>
    %c0_132 = arith.constant 0 : index
    %c0_133 = arith.constant 0 : index
    %121 = vector.load %arg6[%c0_132, %c0_133] : memref<4x1xf32, #tpu.memory_space<vmem>>, vector<4x1xf32>
    %122 = vector.broadcast %121 : vector<4x1xf32> to vector<4x324xf32>
    %123 = arith.addf %120, %122 : vector<4x324xf32>
    %124 = vector.broadcast %0 : vector<1x324xf32> to vector<4x324xf32>
    %125 = arith.mulf %123, %124 : vector<4x324xf32>
    %c4_134 = arith.constant 4 : index
    %c19_135 = arith.constant 19 : index
    %126 = vector.load %arg17[%c4_134, %c19_135] : memref<8x362xf32, #tpu.memory_space<vmem>>, vector<4x324xf32>
    tpu.vector_store %arg17[%c4_134, %c19_135], %125 {strides = array<i32>} : memref<8x362xf32, #tpu.memory_space<vmem>>, vector<4x324xf32>,
    %c0_136 = arith.constant 0 : index
    %c0_137 = arith.constant 0 : index
    %127 = vector.load %arg17[%c0_136, %c0_137] : memref<8x362xf32, #tpu.memory_space<vmem>>, vector<8x362xf32>
    %cst_138 = arith.constant dense<0.000000e+00> : vector<8xf32>
    %128 = vector.multi_reduction <add>, %127, %cst_138 [1] : vector<8x362xf32> to vector<8xf32>
    %129 = vector.shape_cast %128 : vector<8xf32> to vector<8x1xf32>
    %cst_139 = arith.constant 3.906250e-03 : f32
    %130 = vector.broadcast %cst_139 : f32 to vector<8x1xf32>
    %131 = arith.mulf %129, %130 : vector<8x1xf32>
    %c0_140 = arith.constant 0 : index
    %c0_141 = arith.constant 0 : index
    %132 = vector.load %arg8[%c0_140, %c0_141] : memref<8x2xf32, #tpu.memory_space<vmem>>, vector<8x2xf32>
    %133 = vector.broadcast %131 : vector<8x1xf32> to vector<8x2xf32>
    %134 = arith.mulf %132, %133 : vector<8x2xf32>
    %cst_142 = arith.constant dense<0.000000e+00> : vector<2xf32>
    %135 = vector.multi_reduction <add>, %134, %cst_142 [0] : vector<8x2xf32> to vector<2xf32>
    %136 = vector.shape_cast %135 : vector<2xf32> to vector<1x2xf32>
    %c0_143 = arith.constant 0 : index
    %c0_144 = arith.constant 0 : index
    %137 = vector.load %arg9[%c0_143, %c0_144] : memref<1x2xf32, #tpu.memory_space<vmem>>, vector<1x2xf32>
    %138 = arith.addf %136, %137 : vector<1x2xf32>
    %cst_145 = arith.constant 0.000000e+00 : f32
    %139 = vector.broadcast %cst_145 : f32 to vector<1x2xf32>
    %140 = arith.maximumf %138, %139 : vector<1x2xf32>
    %c0_146 = arith.constant 0 : index
    %c0_147 = arith.constant 0 : index
    %141 = vector.load %arg10[%c0_146, %c0_147] : memref<8x2xf32, #tpu.memory_space<vmem>>, vector<8x2xf32>
    %142 = vector.broadcast %140 : vector<1x2xf32> to vector<8x2xf32>
    %143 = arith.mulf %141, %142 : vector<8x2xf32>
    %cst_148 = arith.constant dense<0.000000e+00> : vector<8xf32>
    %144 = vector.multi_reduction <add>, %143, %cst_148 [1] : vector<8x2xf32> to vector<8xf32>
    %145 = vector.shape_cast %144 : vector<8xf32> to vector<8x1xf32>
    %c0_149 = arith.constant 0 : index
    %c0_150 = arith.constant 0 : index
    %146 = vector.load %arg11[%c0_149, %c0_150] : memref<8x1xf32, #tpu.memory_space<vmem>>, vector<8x1xf32>
    %147 = arith.addf %145, %146 : vector<8x1xf32>
    %148 = arith.negf %147 : vector<8x1xf32>
    %149 = math.exp %148 : vector<8x1xf32>
    %cst_151 = arith.constant 1.000000e+00 : f32
    %150 = vector.broadcast %cst_151 : f32 to vector<8x1xf32>
    %151 = arith.addf %150, %149 : vector<8x1xf32>
    %152 = arith.divf %150, %151 : vector<8x1xf32>
    %c0_152 = arith.constant 0 : index
    %c0_153 = arith.constant 0 : index
    %153 = vector.load %arg17[%c0_152, %c0_153] : memref<8x362xf32, #tpu.memory_space<vmem>>, vector<8x324xf32>
    %154 = vector.broadcast %152 : vector<8x1xf32> to vector<8x324xf32>
    %155 = arith.mulf %153, %154 : vector<8x324xf32>
    %c0_154 = arith.constant 0 : index
    %c0_155 = arith.constant 0 : index
    %156 = vector.load %arg18[%c0_154, %c0_155] : memref<72x324xf32, #tpu.memory_space<vmem>>, vector<8x324xf32>
    tpu.vector_store %arg18[%c0_154, %c0_155], %155 {strides = array<i32>} : memref<72x324xf32, #tpu.memory_space<vmem>>, vector<8x324xf32>,
    %c0_156 = arith.constant 0 : index
    %c1_157 = arith.constant 1 : index
    %157 = vector.load %arg17[%c0_156, %c1_157] : memref<8x362xf32, #tpu.memory_space<vmem>>, vector<8x324xf32>
    %158 = vector.broadcast %152 : vector<8x1xf32> to vector<8x324xf32>
    %159 = arith.mulf %157, %158 : vector<8x324xf32>
    %c8_158 = arith.constant 8 : index
    %c0_159 = arith.constant 0 : index
    %160 = vector.load %arg18[%c8_158, %c0_159] : memref<72x324xf32, #tpu.memory_space<vmem>>, vector<8x324xf32>
    tpu.vector_store %arg18[%c8_158, %c0_159], %159 {strides = array<i32>} : memref<72x324xf32, #tpu.memory_space<vmem>>, vector<8x324xf32>,
    %c0_160 = arith.constant 0 : index
    %c2_161 = arith.constant 2 : index
    %161 = vector.load %arg17[%c0_160, %c2_161] : memref<8x362xf32, #tpu.memory_space<vmem>>, vector<8x324xf32>
    %162 = vector.broadcast %152 : vector<8x1xf32> to vector<8x324xf32>
    %163 = arith.mulf %161, %162 : vector<8x324xf32>
    %c16_162 = arith.constant 16 : index
    %c0_163 = arith.constant 0 : index
    %164 = vector.load %arg18[%c16_162, %c0_163] : memref<72x324xf32, #tpu.memory_space<vmem>>, vector<8x324xf32>
    tpu.vector_store %arg18[%c16_162, %c0_163], %163 {strides = array<i32>} : memref<72x324xf32, #tpu.memory_space<vmem>>, vector<8x324xf32>,
    %c0_164 = arith.constant 0 : index
    %c18_165 = arith.constant 18 : index
    %165 = vector.load %arg17[%c0_164, %c18_165] : memref<8x362xf32, #tpu.memory_space<vmem>>, vector<8x324xf32>
    %166 = vector.broadcast %152 : vector<8x1xf32> to vector<8x324xf32>
    %167 = arith.mulf %165, %166 : vector<8x324xf32>
    %c24_166 = arith.constant 24 : index
    %c0_167 = arith.constant 0 : index
    %168 = vector.load %arg18[%c24_166, %c0_167] : memref<72x324xf32, #tpu.memory_space<vmem>>, vector<8x324xf32>
    tpu.vector_store %arg18[%c24_166, %c0_167], %167 {strides = array<i32>} : memref<72x324xf32, #tpu.memory_space<vmem>>, vector<8x324xf32>,
    %c0_168 = arith.constant 0 : index
    %c19_169 = arith.constant 19 : index
    %169 = vector.load %arg17[%c0_168, %c19_169] : memref<8x362xf32, #tpu.memory_space<vmem>>, vector<8x324xf32>
    %170 = vector.broadcast %152 : vector<8x1xf32> to vector<8x324xf32>
    %171 = arith.mulf %169, %170 : vector<8x324xf32>
    %c32_170 = arith.constant 32 : index
    %c0_171 = arith.constant 0 : index
    %172 = vector.load %arg18[%c32_170, %c0_171] : memref<72x324xf32, #tpu.memory_space<vmem>>, vector<8x324xf32>
    tpu.vector_store %arg18[%c32_170, %c0_171], %171 {strides = array<i32>} : memref<72x324xf32, #tpu.memory_space<vmem>>, vector<8x324xf32>,
    %c0_172 = arith.constant 0 : index
    %c20_173 = arith.constant 20 : index
    %173 = vector.load %arg17[%c0_172, %c20_173] : memref<8x362xf32, #tpu.memory_space<vmem>>, vector<8x324xf32>
    %174 = vector.broadcast %152 : vector<8x1xf32> to vector<8x324xf32>
    %175 = arith.mulf %173, %174 : vector<8x324xf32>
    %c40 = arith.constant 40 : index
    %c0_174 = arith.constant 0 : index
    %176 = vector.load %arg18[%c40, %c0_174] : memref<72x324xf32, #tpu.memory_space<vmem>>, vector<8x324xf32>
    tpu.vector_store %arg18[%c40, %c0_174], %175 {strides = array<i32>} : memref<72x324xf32, #tpu.memory_space<vmem>>, vector<8x324xf32>,
    %c0_175 = arith.constant 0 : index
    %c36_176 = arith.constant 36 : index
    %177 = vector.load %arg17[%c0_175, %c36_176] : memref<8x362xf32, #tpu.memory_space<vmem>>, vector<8x324xf32>
    %178 = vector.broadcast %152 : vector<8x1xf32> to vector<8x324xf32>
    %179 = arith.mulf %177, %178 : vector<8x324xf32>
    %c48 = arith.constant 48 : index
    %c0_177 = arith.constant 0 : index
    %180 = vector.load %arg18[%c48, %c0_177] : memref<72x324xf32, #tpu.memory_space<vmem>>, vector<8x324xf32>
    tpu.vector_store %arg18[%c48, %c0_177], %179 {strides = array<i32>} : memref<72x324xf32, #tpu.memory_space<vmem>>, vector<8x324xf32>,
    %c0_178 = arith.constant 0 : index
    %c37_179 = arith.constant 37 : index
    %181 = vector.load %arg17[%c0_178, %c37_179] : memref<8x362xf32, #tpu.memory_space<vmem>>, vector<8x324xf32>
    %182 = vector.broadcast %152 : vector<8x1xf32> to vector<8x324xf32>
    %183 = arith.mulf %181, %182 : vector<8x324xf32>
    %c56_180 = arith.constant 56 : index
    %c0_181 = arith.constant 0 : index
    %184 = vector.load %arg18[%c56_180, %c0_181] : memref<72x324xf32, #tpu.memory_space<vmem>>, vector<8x324xf32>
    tpu.vector_store %arg18[%c56_180, %c0_181], %183 {strides = array<i32>} : memref<72x324xf32, #tpu.memory_space<vmem>>, vector<8x324xf32>,
    %c0_182 = arith.constant 0 : index
    %c38_183 = arith.constant 38 : index
    %185 = vector.load %arg17[%c0_182, %c38_183] : memref<8x362xf32, #tpu.memory_space<vmem>>, vector<8x324xf32>
    %186 = vector.broadcast %152 : vector<8x1xf32> to vector<8x324xf32>
    %187 = arith.mulf %185, %186 : vector<8x324xf32>
    %c64 = arith.constant 64 : index
    %c0_184 = arith.constant 0 : index
    %188 = vector.load %arg18[%c64, %c0_184] : memref<72x324xf32, #tpu.memory_space<vmem>>, vector<8x324xf32>
    tpu.vector_store %arg18[%c64, %c0_184], %187 {strides = array<i32>} : memref<72x324xf32, #tpu.memory_space<vmem>>, vector<8x324xf32>,
    %c0_185 = arith.constant 0 : index
    %c0_186 = arith.constant 0 : index
    %189 = vector.load %arg12[%c0_185, %c0_186] : memref<4x72xf32, #tpu.memory_space<vmem>>, vector<4x72xf32>
    %c0_187 = arith.constant 0 : index
    %c0_188 = arith.constant 0 : index
    %190 = vector.load %arg18[%c0_187, %c0_188] : memref<72x324xf32, #tpu.memory_space<vmem>>, vector<72x324xf32>
    %cst_189 = arith.constant dense<0.000000e+00> : vector<4x324xf32>
    %191 = tpu.matmul %189, %190, %cst_189 {dimension_numbers = #tpu.dot_dimension_numbers<[1], [0], [0], [1], [0, 0, 1, 1], [], []>} : vector<4x72xf32>, vector<72x324xf32>, vector<4x324xf32> -> vector<4x324xf32>
    %c0_190 = arith.constant 0 : index
    %c0_191 = arith.constant 0 : index
    %192 = vector.load %arg13[%c0_190, %c0_191] : memref<4x1xf32, #tpu.memory_space<vmem>>, vector<4x1xf32>
    %193 = vector.broadcast %192 : vector<4x1xf32> to vector<4x324xf32>
    %194 = arith.addf %191, %193 : vector<4x324xf32>
    %c0_192 = arith.constant 0 : index
    %c0_193 = arith.constant 0 : index
    %195 = memref.load %arg14[%c0_192, %c0_193] : memref<1x1xf32, #tpu.memory_space<smem>>
    %cst_194 = arith.constant 0.000000e+00 : f32
    %196 = vector.broadcast %cst_194 : f32 to vector<4x324xf32>
    %197 = arith.cmpf oge, %194, %196 : vector<4x324xf32>
    %198 = vector.broadcast %195 : f32 to vector<4x324xf32>
    %199 = arith.mulf %198, %194 : vector<4x324xf32>
    %200 = arith.select %197, %194, %199 : vector<4x324xi1>, vector<4x324xf32>
    %201 = vector.shape_cast %200 : vector<4x324xf32> to vector<1x4x324xf32>
    %c0_195 = arith.constant 0 : index
    %c0_196 = arith.constant 0 : index
    %c0_197 = arith.constant 0 : index
    %202 = vector.load %arg15[%c0_195, %c0_196, %c0_197] : memref<1x4x324xf32, #tpu.memory_space<vmem>>, vector<1x4x324xf32>
    tpu.vector_store %arg15[%c0_195, %c0_196, %c0_197], %201 {strides = array<i32>} : memref<1x4x324xf32, #tpu.memory_space<vmem>>, vector<1x4x324xf32>,
    return
  }
  func.func @transform_0(%arg0: i32) -> (i32, i32, i32) {
    %c0_i32 = arith.constant 0 : i32
    %c0_i32_0 = arith.constant 0 : i32
    %c0_i32_1 = arith.constant 0 : i32
    return %arg0, %c0_i32, %c0_i32_0 : i32, i32, i32
  }
  func.func @transform_1(%arg0: i32) -> (i32, i32, i32) {
    %c0_i32 = arith.constant 0 : i32
    %c0_i32_0 = arith.constant 0 : i32
    %c0_i32_1 = arith.constant 0 : i32
    return %arg0, %c0_i32, %c0_i32_0 : i32, i32, i32
  }
  func.func @transform_2(%arg0: i32) -> (i32, i32) {
    %c0_i32 = arith.constant 0 : i32
    %c0_i32_0 = arith.constant 0 : i32
    %c0_i32_1 = arith.constant 0 : i32
    return %c0_i32, %c0_i32_0 : i32, i32
  }
  func.func @transform_3(%arg0: i32) -> (i32, i32) {
    %c0_i32 = arith.constant 0 : i32
    %c0_i32_0 = arith.constant 0 : i32
    %c0_i32_1 = arith.constant 0 : i32
    return %c0_i32, %c0_i32_0 : i32, i32
  }
  func.func @transform_4(%arg0: i32) -> (i32, i32) {
    %c0_i32 = arith.constant 0 : i32
    %c0_i32_0 = arith.constant 0 : i32
    %c0_i32_1 = arith.constant 0 : i32
    return %c0_i32, %c0_i32_0 : i32, i32
  }
  func.func @transform_5(%arg0: i32) -> (i32, i32) {
    %c0_i32 = arith.constant 0 : i32
    %c0_i32_0 = arith.constant 0 : i32
    %c0_i32_1 = arith.constant 0 : i32
    return %c0_i32, %c0_i32_0 : i32, i32
  }
  func.func @transform_6(%arg0: i32) -> (i32, i32) {
    %c0_i32 = arith.constant 0 : i32
    %c0_i32_0 = arith.constant 0 : i32
    %c0_i32_1 = arith.constant 0 : i32
    return %c0_i32, %c0_i32_0 : i32, i32
  }
  func.func @transform_7(%arg0: i32) -> (i32, i32) {
    %c0_i32 = arith.constant 0 : i32
    %c0_i32_0 = arith.constant 0 : i32
    %c0_i32_1 = arith.constant 0 : i32
    return %c0_i32, %c0_i32_0 : i32, i32
  }
  func.func @transform_8(%arg0: i32) -> (i32, i32) {
    %c0_i32 = arith.constant 0 : i32
    %c0_i32_0 = arith.constant 0 : i32
    %c0_i32_1 = arith.constant 0 : i32
    return %c0_i32, %c0_i32_0 : i32, i32
  }
  func.func @transform_9(%arg0: i32) -> (i32, i32) {
    %c0_i32 = arith.constant 0 : i32
    %c0_i32_0 = arith.constant 0 : i32
    %c0_i32_1 = arith.constant 0 : i32
    return %c0_i32, %c0_i32_0 : i32, i32
  }
  func.func @transform_10(%arg0: i32) -> (i32, i32) {
    %c0_i32 = arith.constant 0 : i32
    %c0_i32_0 = arith.constant 0 : i32
    %c0_i32_1 = arith.constant 0 : i32
    return %c0_i32, %c0_i32_0 : i32, i32
  }
  func.func @transform_11(%arg0: i32) -> (i32, i32) {
    %c0_i32 = arith.constant 0 : i32
    %c0_i32_0 = arith.constant 0 : i32
    %c0_i32_1 = arith.constant 0 : i32
    return %c0_i32, %c0_i32_0 : i32, i32
  }
  func.func @transform_12(%arg0: i32) -> (i32, i32) {
    %c0_i32 = arith.constant 0 : i32
    %c0_i32_0 = arith.constant 0 : i32
    %c0_i32_1 = arith.constant 0 : i32
    return %c0_i32, %c0_i32_0 : i32, i32
  }
  func.func @transform_13(%arg0: i32) -> (i32, i32) {
    %c0_i32 = arith.constant 0 : i32
    %c0_i32_0 = arith.constant 0 : i32
    %c0_i32_1 = arith.constant 0 : i32
    return %c0_i32, %c0_i32_0 : i32, i32
  }
  func.func @transform_14(%arg0: i32) -> (i32, i32, i32) {
    %c0_i32 = arith.constant 0 : i32
    %c0_i32_0 = arith.constant 0 : i32
    %c0_i32_1 = arith.constant 0 : i32
    return %arg0, %c0_i32, %c0_i32_0 : i32, i32, i32
  }
}

</mosaic_0001>

<llo_original>
// kernel: tpu_custom_call.1
$region0: #{tpu_custom_call.1}
  #allocation0 [shape = 'u32[]', space=smem, size = 0x4, offset = 0x4, fixed_abs, tag = 'smem constant byte address 0x4 - core index']
  #allocation1 [shape = 'u32[144,128]{1,0:T(1,128)}', space=vmem, size = 0x12000, scoped, tag = 'internal scratch']
  #allocation2 [shape = 'f32[4,362]{1,0:T(4,128)}', space=vmem, size = 0x1800, scoped, tag = 'scratch operand']
  #allocation3 [shape = 'f32[8,362]{1,0:T(8,128)}', space=vmem, size = 0x3000, scoped, tag = 'scratch operand']
  #allocation4 [shape = 'f32[72,324]{1,0:T(8,128)}', space=vmem, size = 0x1b000, scoped, tag = 'scratch operand']
  #allocation5 [shape = 'f32[1,1]{1,0:T(1,128)S(6)}', space=smem, size = 0x200, scoped, tag = 'scoped memory for tpu_custom_call.1']
  %s0 = inlined_call_operand.vmem [shape: f32[2,4,256], index: 0, kind: input, shape index: {}]
  %s1 = inlined_call_operand.vmem [shape: f32[2,4,256], index: 1, kind: input, shape index: {}]
  %s2 = inlined_call_operand.vmem [shape: f32[4,36], index: 2, kind: input, shape index: {}]
  %s3 = inlined_call_operand.vmem [shape: f32[4,36], index: 3, kind: input, shape index: {}]
  %s4 = inlined_call_operand.vmem [shape: f32[4,1], index: 4, kind: input, shape index: {}]
  %s5 = inlined_call_operand.vmem [shape: f32[4,1], index: 5, kind: input, shape index: {}]
  %s6 = inlined_call_operand.vmem [shape: f32[1,324], index: 6, kind: input, shape index: {}]
  %s7 = inlined_call_operand.vmem [shape: f32[8,2], index: 7, kind: input, shape index: {}]
  %s8 = inlined_call_operand.vmem [shape: f32[1,2], index: 8, kind: input, shape index: {}]
  %s9 = inlined_call_operand.vmem [shape: f32[8,2], index: 9, kind: input, shape index: {}]
  %s10 = inlined_call_operand.vmem [shape: f32[8,1], index: 10, kind: input, shape index: {}]
  %s11 = inlined_call_operand.vmem [shape: f32[4,72], index: 11, kind: input, shape index: {}]
  %s12 = inlined_call_operand.vmem [shape: f32[4,1], index: 12, kind: input, shape index: {}]
  %s13 = inlined_call_operand.<no memory space> [shape: f32[1,1], index: 13, kind: input, shape index: {}]
  %s14 = inlined_call_operand.hbm [shape: f32[2,4,324], index: 14, kind: output, shape index: {}]
  %s15 = sld [smem:[#allocation0]]
  $region89: #{tpu_custom_call.1} parent=0
    _
  %s17 = ssub.s32 1, %s15
  %s18 = scalar_select 0, %s17, %s15
  %19 = sst [smem:[#allocation5]] %s13
  $region1: #{tpu_custom_call.1} parent=0
    #allocation6 [shape = 'u8[12288]{0}', space=vmem, size = 0x3000, scoped, tag = 'output window, operand 0']
    #allocation7 [shape = 's32[2]{0}', space=sflag, size = 0x8, scoped, tag = 'scoped memory for tpu_custom_call.1']
    %20 = vsyncpa [#allocation7], 0
    %s21 = scalar_lea.sflag [#allocation7], 1
    %22 = vsyncpa %s21, 0
    loop: start=0, step=1, limit=4
    $region2: #{tpu_custom_call.1} parent=1 // loop_pre_header
      _
    $region3: #{tpu_custom_call.1} parent=1 // loop_header
      %s24 = sphi 0, %s28
      %p25 = scmp.ge.s32.totalorder %s24, 4
      %s34 = sphi 0, %s36
      %s37 = sphi 0, %s34
      %s38 = sphi 0, %s37
      %s54 = sphi 0, %s38
      %s60 = sphi 0, %s62
      %s63 = sphi 0, %s60
      %s64 = sphi 0, %s63
      %s80 = sphi 0, %s64
      %s84 = sphi 0, %s84
      %s86 = sphi 0, %s84
      %s87 = sphi 0, %s86
      %s101 = sphi 0, %s87
      %s105 = sphi 0, %s105
      %s107 = sphi 0, %s105
      %s108 = sphi 0, %s107
      %s122 = sphi 0, %s108
      %s126 = sphi 0, %s126
      %s128 = sphi 0, %s126
      %s129 = sphi 0, %s128
      %s143 = sphi 0, %s129
      %s147 = sphi 0, %s147
      %s149 = sphi 0, %s147
      %s150 = sphi 0, %s149
      %s164 = sphi 0, %s150
      %s168 = sphi 0, %s168
      %s170 = sphi 0, %s168
      %s171 = sphi 0, %s170
      %s185 = sphi 0, %s171
      %s189 = sphi 0, %s189
      %s191 = sphi 0, %s189
      %s192 = sphi 0, %s191
      %s206 = sphi 0, %s192
      %s210 = sphi 0, %s210
      %s212 = sphi 0, %s210
      %s213 = sphi 0, %s212
      %s227 = sphi 0, %s213
      %s231 = sphi 0, %s231
      %s233 = sphi 0, %s231
      %s234 = sphi 0, %s233
      %s248 = sphi 0, %s234
      %s252 = sphi 0, %s252
      %s254 = sphi 0, %s252
      %s255 = sphi 0, %s254
      %s269 = sphi 0, %s255
      %s273 = sphi 0, %s273
      %s275 = sphi 0, %s273
      %s276 = sphi 0, %s275
      %s290 = sphi 0, %s276
      %s294 = sphi 0, %s294
      %s296 = sphi 0, %s294
      %s297 = sphi 0, %s296
      %s311 = sphi 0, %s297
      %s315 = sphi 0, %s315
      %s317 = sphi 0, %s315
      %s318 = sphi 0, %s317
      %s332 = sphi 0, %s318
      %s338 = sphi 0, %s340
      %s341 = sphi 0, %s338
      %s342 = sphi 0, %s341
      %s358 = sphi 0, %s342
    $region4: #{tpu_custom_call.1} parent=1 // loop_header_branch
      %27 = sbr.rel (%p25) target = $region8
    $region5: #{tpu_custom_call.1} parent=1 // loop_body
      %s29 = ssub.s32 %s24, 1
      %s30 = ssub.s32 %s24, 2
      %s31 = sadd.s32 %s24, 1
      %s32 = ssub.s32 %s24, %s31
      %p33 = scmp.eq.s32.totalorder %s32, 0
      %s35 = sadd.s32 %s34, 1
      %s36 = scalar_select %p33, %s34, %s35
      %p39 = pneg %p33
      %p40 = scmp.eq.s32.totalorder %s24, 1
      %p41 = por %p39, %p40
      %p42 = scmp.ne.s32.totalorder %s34, %s37
      %p43 = scmp.eq.s32.totalorder %s24, 0
      %p44 = por %p42, %p43
      %p45 = scmp.ne.s32.totalorder %s34, %s37
      %p46 = scmp.eq.s32.totalorder %s29, 1
      %p47 = por %p45, %p46
      %p48 = scmp.ne.s32.totalorder %s37, %s38
      %p49 = scmp.eq.s32.totalorder %s29, 0
      %p50 = por %p48, %p49
      %p51 = scmp.ne.s32.totalorder %s37, %s38
      %p52 = scmp.eq.s32.totalorder %s30, 1
      %p53 = por %p51, %p52
      %p55 = scmp.ne.s32.totalorder %s38, %s54
      %p56 = scmp.eq.s32.totalorder %s30, 0
      %p57 = por %p55, %p56
      %s58 = ssub.s32 %s24, %s31
      %p59 = scmp.eq.s32.totalorder %s58, 0
      %s61 = sadd.s32 %s60, 1
      %s62 = scalar_select %p59, %s60, %s61
      %p65 = pneg %p59
      %p66 = scmp.eq.s32.totalorder %s24, 1
      %p67 = por %p65, %p66
      %p68 = scmp.ne.s32.totalorder %s60, %s63
      %p69 = scmp.eq.s32.totalorder %s24, 0
      %p70 = por %p68, %p69
      %p71 = scmp.ne.s32.totalorder %s60, %s63
      %p72 = scmp.eq.s32.totalorder %s29, 1
      %p73 = por %p71, %p72
      %p74 = scmp.ne.s32.totalorder %s63, %s64
      %p75 = scmp.eq.s32.totalorder %s29, 0
      %p76 = por %p74, %p75
      %p77 = scmp.ne.s32.totalorder %s63, %s64
      %p78 = scmp.eq.s32.totalorder %s30, 1
      %p79 = por %p77, %p78
      %p81 = scmp.ne.s32.totalorder %s64, %s80
      %p82 = scmp.eq.s32.totalorder %s30, 0
      %p83 = por %p81, %p82
      %s85 = sadd.s32 %s84, 1
      %p88 = scmp.eq.s32.totalorder %s24, 1
      %p89 = scmp.ne.s32.totalorder %s84, %s86
      %p90 = scmp.eq.s32.totalorder %s24, 0
      %p91 = por %p89, %p90
      %p92 = scmp.ne.s32.totalorder %s84, %s86
      %p93 = scmp.eq.s32.totalorder %s29, 1
      %p94 = por %p92, %p93
      %p95 = scmp.ne.s32.totalorder %s86, %s87
      %p96 = scmp.eq.s32.totalorder %s29, 0
      %p97 = por %p95, %p96
      %p98 = scmp.ne.s32.totalorder %s86, %s87
      %p99 = scmp.eq.s32.totalorder %s30, 1
      %p100 = por %p98, %p99
      %p102 = scmp.ne.s32.totalorder %s87, %s101
      %p103 = scmp.eq.s32.totalorder %s30, 0
      %p104 = por %p102, %p103
      %s106 = sadd.s32 %s105, 1
      %p109 = scmp.eq.s32.totalorder %s24, 1
      %p110 = scmp.ne.s32.totalorder %s105, %s107
      %p111 = scmp.eq.s32.totalorder %s24, 0
      %p112 = por %p110, %p111
      %p113 = scmp.ne.s32.totalorder %s105, %s107
      %p114 = scmp.eq.s32.totalorder %s29, 1
      %p115 = por %p113, %p114
      %p116 = scmp.ne.s32.totalorder %s107, %s108
      %p117 = scmp.eq.s32.totalorder %s29, 0
      %p118 = por %p116, %p117
      %p119 = scmp.ne.s32.totalorder %s107, %s108
      %p120 = scmp.eq.s32.totalorder %s30, 1
      %p121 = por %p119, %p120
      %p123 = scmp.ne.s32.totalorder %s108, %s122
      %p124 = scmp.eq.s32.totalorder %s30, 0
      %p125 = por %p123, %p124
      %s127 = sadd.s32 %s126, 1
      %p130 = scmp.eq.s32.totalorder %s24, 1
      %p131 = scmp.ne.s32.totalorder %s126, %s128
      %p132 = scmp.eq.s32.totalorder %s24, 0
      %p133 = por %p131, %p132
      %p134 = scmp.ne.s32.totalorder %s126, %s128
      %p135 = scmp.eq.s32.totalorder %s29, 1
      %p136 = por %p134, %p135
      %p137 = scmp.ne.s32.totalorder %s128, %s129
      %p138 = scmp.eq.s32.totalorder %s29, 0
      %p139 = por %p137, %p138
      %p140 = scmp.ne.s32.totalorder %s128, %s129
      %p141 = scmp.eq.s32.totalorder %s30, 1
      %p142 = por %p140, %p141
      %p144 = scmp.ne.s32.totalorder %s129, %s143
      %p145 = scmp.eq.s32.totalorder %s30, 0
      %p146 = por %p144, %p145
      %s148 = sadd.s32 %s147, 1
      %p151 = scmp.eq.s32.totalorder %s24, 1
      %p152 = scmp.ne.s32.totalorder %s147, %s149
      %p153 = scmp.eq.s32.totalorder %s24, 0
      %p154 = por %p152, %p153
      %p155 = scmp.ne.s32.totalorder %s147, %s149
      %p156 = scmp.eq.s32.totalorder %s29, 1
      %p157 = por %p155, %p156
      %p158 = scmp.ne.s32.totalorder %s149, %s150
      %p159 = scmp.eq.s32.totalorder %s29, 0
      %p160 = por %p158, %p159
      %p161 = scmp.ne.s32.totalorder %s149, %s150
      %p162 = scmp.eq.s32.totalorder %s30, 1
      %p163 = por %p161, %p162
      %p165 = scmp.ne.s32.totalorder %s150, %s164
      %p166 = scmp.eq.s32.totalorder %s30, 0
      %p167 = por %p165, %p166
      %s169 = sadd.s32 %s168, 1
      %p172 = scmp.eq.s32.totalorder %s24, 1
      %p173 = scmp.ne.s32.totalorder %s168, %s170
      %p174 = scmp.eq.s32.totalorder %s24, 0
      %p175 = por %p173, %p174
      %p176 = scmp.ne.s32.totalorder %s168, %s170
      %p177 = scmp.eq.s32.totalorder %s29, 1
      %p178 = por %p176, %p177
      %p179 = scmp.ne.s32.totalorder %s170, %s171
      %p180 = scmp.eq.s32.totalorder %s29, 0
      %p181 = por %p179, %p180
      %p182 = scmp.ne.s32.totalorder %s170, %s171
      %p183 = scmp.eq.s32.totalorder %s30, 1
      %p184 = por %p182, %p183
      %p186 = scmp.ne.s32.totalorder %s171, %s185
      %p187 = scmp.eq.s32.totalorder %s30, 0
      %p188 = por %p186, %p187
      %s190 = sadd.s32 %s189, 1
      %p193 = scmp.eq.s32.totalorder %s24, 1
      %p194 = scmp.ne.s32.totalorder %s189, %s191
      %p195 = scmp.eq.s32.totalorder %s24, 0
      %p196 = por %p194, %p195
      %p197 = scmp.ne.s32.totalorder %s189, %s191
      %p198 = scmp.eq.s32.totalorder %s29, 1
      %p199 = por %p197, %p198
      %p200 = scmp.ne.s32.totalorder %s191, %s192
      %p201 = scmp.eq.s32.totalorder %s29, 0
      %p202 = por %p200, %p201
      %p203 = scmp.ne.s32.totalorder %s191, %s192
      %p204 = scmp.eq.s32.totalorder %s30, 1
      %p205 = por %p203, %p204
      %p207 = scmp.ne.s32.totalorder %s192, %s206
      %p208 = scmp.eq.s32.totalorder %s30, 0
      %p209 = por %p207, %p208
      %s211 = sadd.s32 %s210, 1
      %p214 = scmp.eq.s32.totalorder %s24, 1
      %p215 = scmp.ne.s32.totalorder %s210, %s212
      %p216 = scmp.eq.s32.totalorder %s24, 0
      %p217 = por %p215, %p216
      %p218 = scmp.ne.s32.totalorder %s210, %s212
      %p219 = scmp.eq.s32.totalorder %s29, 1
      %p220 = por %p218, %p219
      %p221 = scmp.ne.s32.totalorder %s212, %s213
      %p222 = scmp.eq.s32.totalorder %s29, 0
      %p223 = por %p221, %p222
      %p224 = scmp.ne.s32.totalorder %s212, %s213
      %p225 = scmp.eq.s32.totalorder %s30, 1
      %p226 = por %p224, %p225
      %p228 = scmp.ne.s32.totalorder %s213, %s227
      %p229 = scmp.eq.s32.totalorder %s30, 0
      %p230 = por %p228, %p229
      %s232 = sadd.s32 %s231, 1
      %p235 = scmp.eq.s32.totalorder %s24, 1
      %p236 = scmp.ne.s32.totalorder %s231, %s233
      %p237 = scmp.eq.s32.totalorder %s24, 0
      %p238 = por %p236, %p237
      %p239 = scmp.ne.s32.totalorder %s231, %s233
      %p240 = scmp.eq.s32.totalorder %s29, 1
      %p241 = por %p239, %p240
      %p242 = scmp.ne.s32.totalorder %s233, %s234
      %p243 = scmp.eq.s32.totalorder %s29, 0
      %p244 = por %p242, %p243
      %p245 = scmp.ne.s32.totalorder %s233, %s234
      %p246 = scmp.eq.s32.totalorder %s30, 1
      %p247 = por %p245, %p246
      %p249 = scmp.ne.s32.totalorder %s234, %s248
      %p250 = scmp.eq.s32.totalorder %s30, 0
      %p251 = por %p249, %p250
      %s253 = sadd.s32 %s252, 1
      %p256 = scmp.eq.s32.totalorder %s24, 1
      %p257 = scmp.ne.s32.totalorder %s252, %s254
      %p258 = scmp.eq.s32.totalorder %s24, 0
      %p259 = por %p257, %p258
      %p260 = scmp.ne.s32.totalorder %s252, %s254
      %p261 = scmp.eq.s32.totalorder %s29, 1
      %p262 = por %p260, %p261
      %p263 = scmp.ne.s32.totalorder %s254, %s255
      %p264 = scmp.eq.s32.totalorder %s29, 0
      %p265 = por %p263, %p264
      %p266 = scmp.ne.s32.totalorder %s254, %s255
      %p267 = scmp.eq.s32.totalorder %s30, 1
      %p268 = por %p266, %p267
      %p270 = scmp.ne.s32.totalorder %s255, %s269
      %p271 = scmp.eq.s32.totalorder %s30, 0
      %p272 = por %p270, %p271
      %s274 = sadd.s32 %s273, 1
      %p277 = scmp.eq.s32.totalorder %s24, 1
      %p278 = scmp.ne.s32.totalorder %s273, %s275
      %p279 = scmp.eq.s32.totalorder %s24, 0
      %p280 = por %p278, %p279
      %p281 = scmp.ne.s32.totalorder %s273, %s275
      %p282 = scmp.eq.s32.totalorder %s29, 1
      %p283 = por %p281, %p282
      %p284 = scmp.ne.s32.totalorder %s275, %s276
      %p285 = scmp.eq.s32.totalorder %s29, 0
      %p286 = por %p284, %p285
      %p287 = scmp.ne.s32.totalorder %s275, %s276
      %p288 = scmp.eq.s32.totalorder %s30, 1
      %p289 = por %p287, %p288
      %p291 = scmp.ne.s32.totalorder %s276, %s290
      %p292 = scmp.eq.s32.totalorder %s30, 0
      %p293 = por %p291, %p292
      %s295 = sadd.s32 %s294, 1
      %p298 = scmp.eq.s32.totalorder %s24, 1
      %p299 = scmp.ne.s32.totalorder %s294, %s296
      %p300 = scmp.eq.s32.totalorder %s24, 0
      %p301 = por %p299, %p300
      %p302 = scmp.ne.s32.totalorder %s294, %s296
      %p303 = scmp.eq.s32.totalorder %s29, 1
      %p304 = por %p302, %p303
      %p305 = scmp.ne.s32.totalorder %s296, %s297
      %p306 = scmp.eq.s32.totalorder %s29, 0
      %p307 = por %p305, %p306
      %p308 = scmp.ne.s32.totalorder %s296, %s297
      %p309 = scmp.eq.s32.totalorder %s30, 1
      %p310 = por %p308, %p309
      %p312 = scmp.ne.s32.totalorder %s297, %s311
      %p313 = scmp.eq.s32.totalorder %s30, 0
      %p314 = por %p312, %p313
      %s316 = sadd.s32 %s315, 1
      %p319 = scmp.eq.s32.totalorder %s24, 1
      %p320 = scmp.ne.s32.totalorder %s315, %s317
      %p321 = scmp.eq.s32.totalorder %s24, 0
      %p322 = por %p320, %p321
      %p323 = scmp.ne.s32.totalorder %s315, %s317
      %p324 = scmp.eq.s32.totalorder %s29, 1
      %p325 = por %p323, %p324
      %p326 = scmp.ne.s32.totalorder %s317, %s318
      %p327 = scmp.eq.s32.totalorder %s29, 0
      %p328 = por %p326, %p327
      %p329 = scmp.ne.s32.totalorder %s317, %s318
      %p330 = scmp.eq.s32.totalorder %s30, 1
      %p331 = por %p329, %p330
      %p333 = scmp.ne.s32.totalorder %s318, %s332
      %p334 = scmp.eq.s32.totalorder %s30, 0
      %p335 = por %p333, %p334
      %s336 = ssub.s32 %s24, %s31
      %p337 = scmp.eq.s32.totalorder %s336, 0
      %s339 = sadd.s32 %s338, 1
      %s340 = scalar_select %p337, %s338, %s339
      %p343 = pneg %p337
      %p344 = scmp.eq.s32.totalorder %s24, 1
      %p345 = por %p343, %p344
      %p346 = scmp.ne.s32.totalorder %s338, %s341
      %p347 = scmp.eq.s32.totalorder %s24, 0
      %p348 = por %p346, %p347
      %p349 = scmp.ne.s32.totalorder %s338, %s341
      %p350 = scmp.eq.s32.totalorder %s29, 1
      %p351 = por %p349, %p350
      %p352 = scmp.ne.s32.totalorder %s341, %s342
      %p353 = scmp.eq.s32.totalorder %s29, 0
      %p354 = por %p352, %p353
      %p355 = scmp.ne.s32.totalorder %s341, %s342
      %p356 = scmp.eq.s32.totalorder %s30, 1
      %p357 = por %p355, %p356
      %p359 = scmp.ne.s32.totalorder %s342, %s358
      %p360 = scmp.eq.s32.totalorder %s30, 0
      %p361 = por %p359, %p360
      %p362 = scmp.le.s32.totalorder 1, %s24
      %p363 = scmp.lt.s32.totalorder %s24, 3
      %p364 = pnand %p362, %p363
      %p365 = pneg %p364
      // Predicated region
      $region9: #{tpu_custom_call.1} parent=5 // pred_check
        _
      $region10: #{tpu_custom_call.1} parent=5 // pred_check_branch
        %367 = sbr.rel (%p364) target = $region12
      $region11: #{tpu_custom_call.1} parent=5 // pred_region
        %s368 = ssub.s32 %s24, 1
        // Predicated region
        $region13: #{tpu_custom_call.1} parent=11 // pred_check
          %p369 = pneg %p97
        $region14: #{tpu_custom_call.1} parent=11 // pred_check_branch
          %371 = sbr.rel (%p369) target = $region16
        $region15: #{tpu_custom_call.1} parent=11 // pred_region
          _
        $region16: #{tpu_custom_call.1} parent=11 // pred_fallthru
          _
        // Predicated region
        $region17: #{tpu_custom_call.1} parent=11 // pred_check
          %p372 = pneg %p118
        $region18: #{tpu_custom_call.1} parent=11 // pred_check_branch
          %374 = sbr.rel (%p372) target = $region20
        $region19: #{tpu_custom_call.1} parent=11 // pred_region
          _
        $region20: #{tpu_custom_call.1} parent=11 // pred_fallthru
          _
        // Predicated region
        $region21: #{tpu_custom_call.1} parent=11 // pred_check
          %p375 = pneg %p139
        $region22: #{tpu_custom_call.1} parent=11 // pred_check_branch
          %377 = sbr.rel (%p375) target = $region24
        $region23: #{tpu_custom_call.1} parent=11 // pred_region
          _
        $region24: #{tpu_custom_call.1} parent=11 // pred_fallthru
          _
        // Predicated region
        $region25: #{tpu_custom_call.1} parent=11 // pred_check
          %p378 = pneg %p160
        $region26: #{tpu_custom_call.1} parent=11 // pred_check_branch
          %380 = sbr.rel (%p378) target = $region28
        $region27: #{tpu_custom_call.1} parent=11 // pred_region
          _
        $region28: #{tpu_custom_call.1} parent=11 // pred_fallthru
          _
        // Predicated region
        $region29: #{tpu_custom_call.1} parent=11 // pred_check
          %p381 = pneg %p181
        $region30: #{tpu_custom_call.1} parent=11 // pred_check_branch
          %383 = sbr.rel (%p381) target = $region32
        $region31: #{tpu_custom_call.1} parent=11 // pred_region
          _
        $region32: #{tpu_custom_call.1} parent=11 // pred_fallthru
          _
        // Predicated region
        $region33: #{tpu_custom_call.1} parent=11 // pred_check
          %p384 = pneg %p202
        $region34: #{tpu_custom_call.1} parent=11 // pred_check_branch
          %386 = sbr.rel (%p384) target = $region36
        $region35: #{tpu_custom_call.1} parent=11 // pred_region
          _
        $region36: #{tpu_custom_call.1} parent=11 // pred_fallthru
          _
        // Predicated region
        $region37: #{tpu_custom_call.1} parent=11 // pred_check
          %p387 = pneg %p223
        $region38: #{tpu_custom_call.1} parent=11 // pred_check_branch
          %389 = sbr.rel (%p387) target = $region40
        $region39: #{tpu_custom_call.1} parent=11 // pred_region
          _
        $region40: #{tpu_custom_call.1} parent=11 // pred_fallthru
          _
        // Predicated region
        $region41: #{tpu_custom_call.1} parent=11 // pred_check
          %p390 = pneg %p244
        $region42: #{tpu_custom_call.1} parent=11 // pred_check_branch
          %392 = sbr.rel (%p390) target = $region44
        $region43: #{tpu_custom_call.1} parent=11 // pred_region
          _
        $region44: #{tpu_custom_call.1} parent=11 // pred_fallthru
          _
        // Predicated region
        $region45: #{tpu_custom_call.1} parent=11 // pred_check
          %p393 = pneg %p265
        $region46: #{tpu_custom_call.1} parent=11 // pred_check_branch
          %395 = sbr.rel (%p393) target = $region48
        $region47: #{tpu_custom_call.1} parent=11 // pred_region
          _
        $region48: #{tpu_custom_call.1} parent=11 // pred_fallthru
          _
        // Predicated region
        $region49: #{tpu_custom_call.1} parent=11 // pred_check
          %p396 = pneg %p286
        $region50: #{tpu_custom_call.1} parent=11 // pred_check_branch
          %398 = sbr.rel (%p396) target = $region52
        $region51: #{tpu_custom_call.1} parent=11 // pred_region
          _
        $region52: #{tpu_custom_call.1} parent=11 // pred_fallthru
          _
        // Predicated region
        $region53: #{tpu_custom_call.1} parent=11 // pred_check
          %p399 = pneg %p307
        $region54: #{tpu_custom_call.1} parent=11 // pred_check_branch
          %401 = sbr.rel (%p399) target = $region56
        $region55: #{tpu_custom_call.1} parent=11 // pred_region
          _
        $region56: #{tpu_custom_call.1} parent=11 // pred_fallthru
          _
        // Predicated region
        $region57: #{tpu_custom_call.1} parent=11 // pred_check
          %p402 = pneg %p328
        $region58: #{tpu_custom_call.1} parent=11 // pred_check_branch
          %404 = sbr.rel (%p402) target = $region60
        $region59: #{tpu_custom_call.1} parent=11 // pred_region
          _
        $region60: #{tpu_custom_call.1} parent=11 // pred_fallthru
          _
      $region12: #{tpu_custom_call.1} parent=5 // pred_fallthru
        _
      %p405 = scmp.lt.s32.totalorder %s24, 2
      // Predicated region
      $region61: #{tpu_custom_call.1} parent=5 // pred_check
        %p406 = pneg %p405
      $region62: #{tpu_custom_call.1} parent=5 // pred_check_branch
        %408 = sbr.rel (%p406) target = $region64
      $region63: #{tpu_custom_call.1} parent=5 // pred_region
        // Predicated region
        $region65: #{tpu_custom_call.1} parent=63 // pred_check
          %p409 = pneg %p44
        $region66: #{tpu_custom_call.1} parent=63 // pred_check_branch
          %411 = sbr.rel (%p409) target = $region68
        $region67: #{tpu_custom_call.1} parent=63 // pred_region
          %p412 = scmp.lt.s32.totalorder %s24, 1
          %s413 = scalar_select %p412, %s24, 1
          %s414 = smul.addr %s413, 2
          %s415 = smul.addr %s414, 4
          %s416 = scalar_lea.vmem %s0, %s415
        $region68: #{tpu_custom_call.1} parent=63 // pred_fallthru
          _
        // Predicated region
        $region69: #{tpu_custom_call.1} parent=63 // pred_check
          %p417 = pneg %p70
        $region70: #{tpu_custom_call.1} parent=63 // pred_check_branch
          %419 = sbr.rel (%p417) target = $region72
        $region71: #{tpu_custom_call.1} parent=63 // pred_region
          %p420 = scmp.lt.s32.totalorder %s24, 1
          %s421 = scalar_select %p420, %s24, 1
          %s422 = smul.addr %s421, 2
          %s423 = smul.addr %s422, 4
          %s424 = scalar_lea.vmem %s1, %s423
        $region72: #{tpu_custom_call.1} parent=63 // pred_fallthru
          _
      $region64: #{tpu_custom_call.1} parent=5 // pred_fallthru
        _
      %p425 = scmp.le.s32.totalorder 1, %s24
      %p426 = scmp.lt.s32.totalorder %s24, 3
      %p427 = pnand %p425, %p426
      %p428 = pneg %p427
      // Predicated region
      $region73: #{tpu_custom_call.1} parent=5 // pred_check
        _
      $region74: #{tpu_custom_call.1} parent=5 // pred_check_branch
        %430 = sbr.rel (%p427) target = $region76
      $region75: #{tpu_custom_call.1} parent=5 // pred_region
        %s431 = ssub.s32 %s24, 1
        %p432 = scmp.lt.s32.totalorder %s29, 1
        %s433 = scalar_select %p432, %s29, 1
        %s434 = smul.addr %s433, 2
        %s435 = smul.addr %s434, 4
        %s436 = scalar_lea.vmem %s0, %s435
        %p437 = pneg %p50
        %p438 = pneg %p47
        %p439 = scmp.lt.s32.totalorder %s29, 1
        %s440 = scalar_select %p439, %s29, 1
        %s441 = smul.addr %s440, 2
        %s442 = smul.addr %s441, 4
        %s443 = scalar_lea.vmem %s1, %s442
        %p444 = pneg %p76
        %p445 = pneg %p73
        %p446 = pneg %p97
        %p447 = pneg %p94
        %p448 = pneg %p118
        %p449 = pneg %p115
        %p450 = pneg %p139
        %p451 = pneg %p136
        %p452 = pneg %p160
        %p453 = pneg %p157
        %p454 = pneg %p181
        %p455 = pneg %p178
        %p456 = pneg %p202
        %p457 = pneg %p199
        %p458 = pneg %p223
        %p459 = pneg %p220
        %p460 = pneg %p244
        %p461 = pneg %p241
        %p462 = pneg %p265
        %p463 = pneg %p262
        %p464 = pneg %p286
        %p465 = pneg %p283
        %p466 = pneg %p307
        %p467 = pneg %p304
        %p468 = pneg %p328
        %p469 = pneg %p325
        %p470 = pneg %p354
        %p471 = pneg %p351
        %s472 = sand.u32 %s341, 1
        %s473 = scalar_lea.sflag [#allocation7], %s472
        %s474 = sand.u32 %s341, 1
        %s475 = smul.addr %s474, 12
        %s476 = scalar_lea.vmem [#allocation6], %s475
        %p477 = scmp.lt.s32.totalorder %s29, 1
        %s478 = scalar_select %p477, %s29, 1
        %s479 = smul.addr %s478, 2
        %s480 = smul.addr %s479, 4
        %s481 = scalar_lea.vmem %s0, %s480
        %p482 = scmp.lt.s32.totalorder %s29, 1
        %s483 = scalar_select %p482, %s29, 1
        %s484 = smul.addr %s483, 2
        %s485 = smul.addr %s484, 4
        %s486 = scalar_lea.vmem %s1, %s485
        %v487 = vld [vmem:[%s6] sm:$0x7]
        %488 = vst [vmem:[#allocation2] sm:$0xff] 0.0
        %vm489 = vcmask 863232
        %490 = vst.msk [vmem:[#allocation2 + $0x8] sm:$0xf] %vm489, 0.0
        %491 = vst [vmem:[#allocation3] sm:$0xff] 0.0
        %492 = vst [vmem:[#allocation3 + $0x8] sm:$0xff] 0.0
        %vm493 = vcmask 867328
        %494 = vst.msk [vmem:[#allocation3 + $0x10] sm:$0xff] %vm493, 0.0
        %v495 = vld [vmem:[%s481] sm:$0xff]
        %497 = vrot.lane.b32.xlu0 %v495, 38
        %v498 = vpop.permute.xlu0 %497
        %vm500 = vcmask 437552
        %501 = vst.msk [vmem:[#allocation2] sm:$0xf] %vm500, %v498
        %502 = vrot.lane.b32.xlu0 %v495, 40
        %v503 = vpop.permute.xlu0 %502
        %vm505 = vcmask 585152
        %506 = vst.msk [vmem:[#allocation2] sm:$0xf] %vm505, %v503
        %507 = vrot.lane.b32.xlu0 %v495, 42
        %v508 = vpop.permute.xlu0 %507
        %vm510 = vcmask 732752
        %511 = vst.msk [vmem:[#allocation2] sm:$0xf] %vm510, %v508
        %512 = vrot.lane.b32.xlu0 %v495, 44
        %v513 = vpop.permute.xlu0 %512
        %vm515 = vcmask 880352
        %516 = vst.msk [vmem:[#allocation2] sm:$0xf] %vm515, %v513
        %517 = vrot.lane.b32.xlu0 %v495, 46
        %v518 = vpop.permute.xlu0 %517
        %vm520 = vcmask 1027952
        %521 = vst.msk [vmem:[#allocation2] sm:$0xf] %vm520, %v518
        %522 = vrot.lane.b32.xlu0 %v495, 48
        %v523 = vpop.permute.xlu0 %522
        %vm525 = vcmask 125952
        %526 = vst.msk [vmem:[#allocation2 + $0x4] sm:$0xf] %vm525, %v523
        %527 = vrot.lane.b32.xlu0 %v495, 50
        %v528 = vpop.permute.xlu0 %527
        %vm530 = vcmask 273552
        %531 = vst.msk [vmem:[#allocation2 + $0x4] sm:$0xf] %vm530, %v528
        %532 = vrot.lane.b32.xlu0 %v495, 52
        %v533 = vpop.permute.xlu0 %532
        %vm535 = vcmask 421152
        %536 = vst.msk [vmem:[#allocation2 + $0x4] sm:$0xf] %vm535, %v533
        %537 = vrot.lane.b32.xlu0 %v495, 54
        %v538 = vpop.permute.xlu0 %537
        %v539 = vrot.slane %v538, 4
        %vm540 = vcmask 441344
        %v541 = vsel %vm540, %v538, %v539
        %vm543 = vcmask 568752
        %544 = vst.msk [vmem:[#allocation2 + $0x4] sm:$0xf] %vm543, %v541
        %545 = vrot.lane.b32.xlu0 %v495, 56
        %v546 = vpop.permute.xlu0 %545
        %v547 = vrot.slane %v546, 4
        %vm548 = vcmask 457728
        %v549 = vsel %vm548, %v546, %v547
        %vm551 = vcmask 716352
        %552 = vst.msk [vmem:[#allocation2 + $0x4] sm:$0xf] %vm551, %v549
        %553 = vrot.lane.b32.xlu0 %v495, 58
        %v554 = vpop.permute.xlu0 %553
        %v555 = vrot.slane %v554, 4
        %vm556 = vcmask 474112
        %v557 = vsel %vm556, %v554, %v555
        %vm559 = vcmask 863952
        %560 = vst.msk [vmem:[#allocation2 + $0x4] sm:$0xf] %vm559, %v557
        %561 = vrot.lane.b32.xlu0 %v495, 60
        %v562 = vpop.permute.xlu0 %561
        %v563 = vrot.slane %v562, 4
        %vm564 = vcmask 490496
        %v565 = vsel %vm564, %v562, %v563
        %vm567 = vcmask 1011552
        %568 = vst.msk [vmem:[#allocation2 + $0x4] sm:$0xf] %vm567, %v565
        %569 = vrot.lane.b32.xlu0 %v495, 62
        %v570 = vpop.permute.xlu0 %569
        %v571 = vrot.slane %v570, 4
        %vm572 = vcmask 506880
        %v573 = vsel %vm572, %v570, %v571
        %vm575 = vcmask 1044464
        %vm576 = vcmask 113668
        %vm577 = vmor %vm576, %vm575
        %578 = vst.msk [vmem:[#allocation2 + $0x4] sm:$0xff] %vm577, %v573
        %579 = vrot.lane.b32.xlu0 %v495, 64
        %v580 = vpop.permute.xlu0 %579
        %v581 = vrot.slane %v580, 4
        %vm583 = vcmask 257152
        %584 = vst.msk [vmem:[#allocation2 + $0x8] sm:$0xf] %vm583, %v581
        %585 = vrot.lane.b32.xlu0 %v495, 66
        %v586 = vpop.permute.xlu0 %585
        %v587 = vrot.slane %v586, 4
        %vm589 = vcmask 404752
        %590 = vst.msk [vmem:[#allocation2 + $0x8] sm:$0xf] %vm589, %v587
        %591 = vrot.lane.b32.xlu0 %v495, 68
        %v592 = vpop.permute.xlu0 %591
        %v593 = vrot.slane %v592, 4
        %vm595 = vcmask 552352
        %596 = vst.msk [vmem:[#allocation2 + $0x8] sm:$0xf] %vm595, %v593
        %v597 = vld [vmem:[#allocation2] sm:$0xff]
        %v598 = vld [vmem:[#allocation2 + $0x8] sm:$0xf]
        %v600 = vcombine.high %v597, %v597
        %602 = vst [vmem:[#allocation4] sm:$0xf] %v597
        %603 = vst [vmem:[#allocation4 + $0x8] sm:$0xf] %v600
        %vm604 = vcmask 551936
        %605 = vst.msk [vmem:[#allocation4 + $0x10] sm:$0xf] %vm604, %v598
        %v606 = vld [vmem:[#allocation2] sm:$0xff]
        %v607 = vld [vmem:[#allocation2 + $0x8] sm:$0xf]
        %v610 = vcombine.low %v606, %v606
        %v611 = vcombine.low %v607, %v607
        %612 = vrot.lane.b32.xlu0 %v610, 127
        %v613 = vpop.permute.xlu0 %612
        %614 = vrot.lane.b32.xlu0 %v606, 127
        %v615 = vpop.permute.xlu0 %614
        %616 = vrot.lane.b32.xlu0 %v611, 127
        %v617 = vpop.permute.xlu0 %616
        %vm618 = vcmask 1039360
        %v619 = vsel %vm618, %v613, %v615
        %v620 = vsel %vm618, %v615, %v617
        %624 = vst [vmem:[#allocation4] sm:$0xf0] %v619
        %625 = vst [vmem:[#allocation4 + $0x8] sm:$0xf0] %v620
        %vm626 = vcmask 556036
        %627 = vst.msk [vmem:[#allocation4 + $0x10] sm:$0xf0] %vm626, %v617
        %v628 = vld [vmem:[#allocation2] sm:$0xff]
        %v629 = vld [vmem:[#allocation2 + $0x8] sm:$0xf]
        %v632 = vcombine.high %v628, %v628
        %633 = vrot.lane.b32.xlu0 %v628, 126
        %v634 = vpop.permute.xlu0 %633
        %635 = vrot.lane.b32.xlu0 %v632, 126
        %v636 = vpop.permute.xlu0 %635
        %637 = vrot.lane.b32.xlu0 %v629, 126
        %v638 = vpop.permute.xlu0 %637
        %vm639 = vcmask 1031168
        %v640 = vsel %vm639, %v634, %v636
        %v641 = vsel %vm639, %v636, %v638
        %645 = vst [vmem:[#allocation4 + $0x18] sm:$0xf] %v640
        %646 = vst [vmem:[#allocation4 + $0x20] sm:$0xf] %v641
        %647 = vst.msk [vmem:[#allocation4 + $0x28] sm:$0xf] %vm604, %v638
        %v648 = vld [vmem:[#allocation2] sm:$0xff]
        %v649 = vld [vmem:[#allocation2 + $0x8] sm:$0xf]
        %v652 = vcombine.low %v648, %v648
        %v653 = vcombine.low %v649, %v649
        %654 = vrot.lane.b32.xlu0 %v652, 110
        %v655 = vpop.permute.xlu0 %654
        %656 = vrot.lane.b32.xlu0 %v648, 110
        %v657 = vpop.permute.xlu0 %656
        %658 = vrot.lane.b32.xlu0 %v653, 110
        %v659 = vpop.permute.xlu0 %658
        %vm660 = vcmask 900096
        %v661 = vsel %vm660, %v655, %v657
        %v662 = vsel %vm660, %v657, %v659
        %666 = vst [vmem:[#allocation4 + $0x18] sm:$0xf0] %v661
        %667 = vst [vmem:[#allocation4 + $0x20] sm:$0xf0] %v662
        %668 = vst.msk [vmem:[#allocation4 + $0x28] sm:$0xf0] %vm626, %v659
        %v669 = vld [vmem:[#allocation2] sm:$0xff]
        %v670 = vld [vmem:[#allocation2 + $0x8] sm:$0xf]
        %v673 = vcombine.high %v669, %v669
        %674 = vrot.lane.b32.xlu0 %v669, 109
        %v675 = vpop.permute.xlu0 %674
        %676 = vrot.lane.b32.xlu0 %v673, 109
        %v677 = vpop.permute.xlu0 %676
        %678 = vrot.lane.b32.xlu0 %v670, 109
        %v679 = vpop.permute.xlu0 %678
        %vm680 = vcmask 891904
        %v681 = vsel %vm680, %v675, %v677
        %v682 = vsel %vm680, %v677, %v679
        %686 = vst [vmem:[#allocation4 + $0x30] sm:$0xf] %v681
        %687 = vst [vmem:[#allocation4 + $0x38] sm:$0xf] %v682
        %688 = vst.msk [vmem:[#allocation4 + $0x40] sm:$0xf] %vm604, %v679
        %v689 = vld [vmem:[#allocation2] sm:$0xff]
        %v690 = vld [vmem:[#allocation2 + $0x8] sm:$0xf]
        %v693 = vcombine.low %v689, %v689
        %v694 = vcombine.low %v690, %v690
        %695 = vrot.lane.b32.xlu0 %v693, 108
        %v696 = vpop.permute.xlu0 %695
        %697 = vrot.lane.b32.xlu0 %v689, 108
        %v698 = vpop.permute.xlu0 %697
        %699 = vrot.lane.b32.xlu0 %v694, 108
        %v700 = vpop.permute.xlu0 %699
        %vm701 = vcmask 883712
        %v702 = vsel %vm701, %v696, %v698
        %v703 = vsel %vm701, %v698, %v700
        %707 = vst [vmem:[#allocation4 + $0x30] sm:$0xf0] %v702
        %708 = vst [vmem:[#allocation4 + $0x38] sm:$0xf0] %v703
        %709 = vst.msk [vmem:[#allocation4 + $0x40] sm:$0xf0] %vm626, %v700
        %v710 = vld [vmem:[#allocation2] sm:$0xff]
        %v711 = vld [vmem:[#allocation2 + $0x8] sm:$0xf]
        %v714 = vcombine.high %v710, %v710
        %715 = vrot.lane.b32.xlu0 %v710, 92
        %v716 = vpop.permute.xlu0 %715
        %717 = vrot.lane.b32.xlu0 %v714, 92
        %v718 = vpop.permute.xlu0 %717
        %719 = vrot.lane.b32.xlu0 %v711, 92
        %v720 = vpop.permute.xlu0 %719
        %vm721 = vcmask 752640
        %v722 = vsel %vm721, %v716, %v718
        %v723 = vsel %vm721, %v718, %v720
        %727 = vst [vmem:[#allocation4 + $0x48] sm:$0xf] %v722
        %728 = vst [vmem:[#allocation4 + $0x50] sm:$0xf] %v723
        %729 = vst.msk [vmem:[#allocation4 + $0x58] sm:$0xf] %vm604, %v720
        %v730 = vld [vmem:[#allocation2] sm:$0xff]
        %v731 = vld [vmem:[#allocation2 + $0x8] sm:$0xf]
        %v734 = vcombine.low %v730, %v730
        %v735 = vcombine.low %v731, %v731
        %736 = vrot.lane.b32.xlu0 %v734, 91
        %v737 = vpop.permute.xlu0 %736
        %738 = vrot.lane.b32.xlu0 %v730, 91
        %v739 = vpop.permute.xlu0 %738
        %740 = vrot.lane.b32.xlu0 %v735, 91
        %v741 = vpop.permute.xlu0 %740
        %vm742 = vcmask 744448
        %v743 = vsel %vm742, %v737, %v739
        %v744 = vsel %vm742, %v739, %v741
        %748 = vst [vmem:[#allocation4 + $0x48] sm:$0xf0] %v743
        %749 = vst [vmem:[#allocation4 + $0x50] sm:$0xf0] %v744
        %750 = vst.msk [vmem:[#allocation4 + $0x58] sm:$0xf0] %vm626, %v741
        %v751 = vld [vmem:[#allocation2] sm:$0xff]
        %v752 = vld [vmem:[#allocation2 + $0x8] sm:$0xf]
        %v755 = vcombine.high %v751, %v751
        %756 = vrot.lane.b32.xlu0 %v751, 90
        %v757 = vpop.permute.xlu0 %756
        %758 = vrot.lane.b32.xlu0 %v755, 90
        %v759 = vpop.permute.xlu0 %758
        %760 = vrot.lane.b32.xlu0 %v752, 90
        %v761 = vpop.permute.xlu0 %760
        %vm762 = vcmask 736256
        %v763 = vsel %vm762, %v757, %v759
        %v764 = vsel %vm762, %v759, %v761
        %768 = vst [vmem:[#allocation4 + $0x60] sm:$0xf] %v763
        %769 = vst [vmem:[#allocation4 + $0x68] sm:$0xf] %v764
        %770 = vst.msk [vmem:[#allocation4 + $0x70] sm:$0xf] %vm604, %v761
        %v771 = vld [vmem:[%s2] sm:$0xf]
        %v772 = vld [vmem:[#allocation4] sm:$0xff]
        %v773 = vld [vmem:[#allocation4 + $0x8] sm:$0xff]
        %v774 = vld [vmem:[#allocation4 + $0x10] sm:$0xff]
        %v775 = vld [vmem:[#allocation4 + $0x18] sm:$0xff]
        %v776 = vld [vmem:[#allocation4 + $0x20] sm:$0xff]
        %v777 = vld [vmem:[#allocation4 + $0x28] sm:$0xff]
        %v778 = vld [vmem:[#allocation4 + $0x30] sm:$0xff]
        %v779 = vld [vmem:[#allocation4 + $0x38] sm:$0xff]
        %v780 = vld [vmem:[#allocation4 + $0x40] sm:$0xff]
        %v781 = vld [vmem:[#allocation4 + $0x48] sm:$0xff]
        %v782 = vld [vmem:[#allocation4 + $0x50] sm:$0xff]
        %v783 = vld [vmem:[#allocation4 + $0x58] sm:$0xff]
        %v784 = vld [vmem:[#allocation4 + $0x60] sm:$0xf]
        %v785 = vld [vmem:[#allocation4 + $0x68] sm:$0xf]
        %v786 = vld [vmem:[#allocation4 + $0x70] sm:$0xf]
        %v787 = vld [vmem:[%s4] sm:$0xf]
        %789 = vset.pattern.permute.xlu0 0
        %790 = vperm.xlu0 %789, %v787
        %v791 = vpop.permute.xlu0 %790
        %vm793 = vcmask 293888
        %v795 = vsel %vm793, %v771, 0
        %vm797 = vcmask 1043456
        %v799 = vsel %vm797, %v784, 0
        %v802 = vsel %vm797, %v785, 0
        %v805 = vsel %vm797, %v786, 0
        %807 = vmatprep.subr.mxu0 %v773
        %808 = vmatpush1.msra.mxu0 %v772
        %809 = vmatprep.subr.mxu0 %v776
        %810 = vmatpush1.msra.mxu0 %v775
        %811 = vmatprep.subr.mxu0 %v779
        %812 = vmatpush1.msra.mxu0 %v778
        %813 = vmatprep.subr.mxu0 %v782
        %814 = vmatpush1.msra.mxu0 %v781
        %815 = vmatprep.subr.mxu0 %v802
        %816 = vmatpush1.msra.mxu0 %v799
        %817 = vmatprep.subr.mxu0 0.0
        %818 = vmatpush1.msra.mxu0 0.0
        %819 = vmatprep.subr.mxu0 0.0
        %820 = vmatpush1.msra.mxu0 0.0
        %821 = vmatprep.subr.mxu0 0.0
        %822 = vmatpush1.msra.mxu0 0.0
        %823 = vmatprep.subr.mxu0 0.0
        %824 = vmatpush1.msra.mxu0 0.0
        %825 = vmatprep.subr.mxu0 0.0
        %826 = vmatpush1.msra.mxu0 0.0
        %827 = vmatprep.subr.mxu0 0.0
        %828 = vmatpush1.msra.mxu0 0.0
        %829 = vmatprep.subr.mxu0 0.0
        %830 = vmatpush1.msra.mxu0 0.0
        %831 = vmatprep.subr.mxu0 0.0
        %832 = vmatpush1.msra.mxu0 0.0
        %833 = vmatprep.subr.mxu0 0.0
        %834 = vmatpush1.msra.mxu0 0.0
        %835 = vmatprep.subr.mxu0 0.0
        %836 = vmatpush1.msra.mxu0 0.0
        %837 = vmatprep.subr.mxu0 0.0
        %838 = vmatpush1.msra.mxu0 0.0
        %839 = vmatprep.subr.mxu0 0.0
        %840 = vmatpush1.msra.mxu0 0.0
        %841 = vmatprep.subr.mxu0 0.0
        %842 = vmatpush1.msra.mxu0 0.0
        %843 = vmatprep.subr.mxu0 0.0
        %844 = vmatpush1.msra.mxu0 0.0
        %845 = vmatprep.subr.mxu0 0.0
        %846 = vmatpush1.msra.mxu0 0.0
        %847 = vmatprep.subr.mxu0 0.0
        %848 = vmatpush1.msra.mxu0 0.0
        %849 = vmatprep.subr.mxu0 0.0
        %850 = vmatpush1.msra.mxu0 0.0
        %851 = vmatprep.subr.mxu0 0.0
        %852 = vmatpush1.msra.mxu0 0.0
        %853 = vmatprep.subr.mxu0 0.0
        %854 = vmatpush1.msra.mxu0 0.0
        %855 = vmatprep.subr.mxu0 0.0
        %856 = vmatpush1.msra.mxu0 0.0
        %857 = vmatprep.subr.mxu0 0.0
        %858 = vmatpush1.msra.mxu0 0.0
        %859 = vmatprep.subr.mxu0 0.0
        %860 = vmatpush1.msra.mxu0 0.0
        %861 = vmatprep.subr.mxu0 0.0
        %862 = vmatpush1.msra.mxu0 0.0
        %863 = vmatprep.subr.mxu0 0.0
        %864 = vmatpush1.msra.mxu0 0.0
        %865 = vmatprep.subr.mxu0 0.0
        %866 = vmatpush1.msra.mxu0 0.0
        %867 = vmatprep.subr.mxu0 0.0
        %868 = vmatpush1.msra.mxu0 0.0
        %869 = vmatprep.subr.mxu0 0.0
        %870 = vmatpush1.msra.mxu0 0.0
        %871 = vmatprep.mubr.f32.mxu0 0.0
        %872 = vmatmul.mubr.f32.gmra.mrb[0].mxu0 %v795
        %v873 = vpop.f32.mrb[0].mxu0
        %v874 = vadd.f32 %v791, %v873
        %v875 = vpop.f32.mrb[0].mxu0
        %v876 = vadd.f32 %v791, %v875
        %877 = vdwg.mxu0
        %878 = vmatprep.subr.mxu0 0.0
        %879 = vmatpush1.msra.mxu0 %v774
        %880 = vmatprep.subr.mxu0 0.0
        %881 = vmatpush1.msra.mxu0 %v777
        %882 = vmatprep.subr.mxu0 0.0
        %883 = vmatpush1.msra.mxu0 %v780
        %884 = vmatprep.subr.mxu0 0.0
        %885 = vmatpush1.msra.mxu0 %v783
        %886 = vmatprep.subr.mxu0 0.0
        %887 = vmatpush1.msra.mxu0 %v805
        %888 = vmatprep.subr.mxu0 0.0
        %889 = vmatpush1.msra.mxu0 0.0
        %890 = vmatprep.subr.mxu0 0.0
        %891 = vmatpush1.msra.mxu0 0.0
        %892 = vmatprep.subr.mxu0 0.0
        %893 = vmatpush1.msra.mxu0 0.0
        %894 = vmatprep.subr.mxu0 0.0
        %895 = vmatpush1.msra.mxu0 0.0
        %896 = vmatprep.subr.mxu0 0.0
        %897 = vmatpush1.msra.mxu0 0.0
        %898 = vmatprep.subr.mxu0 0.0
        %899 = vmatpush1.msra.mxu0 0.0
        %900 = vmatprep.subr.mxu0 0.0
        %901 = vmatpush1.msra.mxu0 0.0
        %902 = vmatprep.subr.mxu0 0.0
        %903 = vmatpush1.msra.mxu0 0.0
        %904 = vmatprep.subr.mxu0 0.0
        %905 = vmatpush1.msra.mxu0 0.0
        %906 = vmatprep.subr.mxu0 0.0
        %907 = vmatpush1.msra.mxu0 0.0
        %908 = vmatprep.subr.mxu0 0.0
        %909 = vmatpush1.msra.mxu0 0.0
        %910 = vmatprep.subr.mxu0 0.0
        %911 = vmatpush1.msra.mxu0 0.0
        %912 = vmatprep.subr.mxu0 0.0
        %913 = vmatpush1.msra.mxu0 0.0
        %914 = vmatprep.subr.mxu0 0.0
        %915 = vmatpush1.msra.mxu0 0.0
        %916 = vmatprep.subr.mxu0 0.0
        %917 = vmatpush1.msra.mxu0 0.0
        %918 = vmatprep.subr.mxu0 0.0
        %919 = vmatpush1.msra.mxu0 0.0
        %920 = vmatprep.subr.mxu0 0.0
        %921 = vmatpush1.msra.mxu0 0.0
        %922 = vmatprep.subr.mxu0 0.0
        %923 = vmatpush1.msra.mxu0 0.0
        %924 = vmatprep.subr.mxu0 0.0
        %925 = vmatpush1.msra.mxu0 0.0
        %926 = vmatprep.subr.mxu0 0.0
        %927 = vmatpush1.msra.mxu0 0.0
        %928 = vmatprep.subr.mxu0 0.0
        %929 = vmatpush1.msra.mxu0 0.0
        %930 = vmatprep.subr.mxu0 0.0
        %931 = vmatpush1.msra.mxu0 0.0
        %932 = vmatprep.subr.mxu0 0.0
        %933 = vmatpush1.msra.mxu0 0.0
        %934 = vmatprep.subr.mxu0 0.0
        %935 = vmatpush1.msra.mxu0 0.0
        %936 = vmatprep.subr.mxu0 0.0
        %937 = vmatpush1.msra.mxu0 0.0
        %938 = vmatprep.subr.mxu0 0.0
        %939 = vmatpush1.msra.mxu0 0.0
        %940 = vmatprep.subr.mxu0 0.0
        %941 = vmatpush1.msra.mxu0 0.0
        %942 = vmatprep.mubr.f32.mxu0 0.0
        %943 = vmatmul.mubr.f32.gmra.mrb[0].mxu0 %v795
        %v944 = vpop.f32.mrb[0].mxu0
        %v945 = vadd.f32 %v791, %v944
        %v946 = vpop.f32.mrb[0].mxu0
        %947 = vdwg.mxu0
        %v949 = vlaneseq
        %v950 = vshrl.u32 %v949, 7
        %v951 = vsub.s32 0, %v950
        %v952 = vrot.slane %v487, %v951
        %v953 = vlaneseq
        %v954 = vshrl.u32 %v953, 7
        %v955 = vsub.s32 1, %v954
        %v956 = vrot.slane %v487, %v955
        %v957 = vlaneseq
        %v958 = vshrl.u32 %v957, 7
        %v959 = vsub.s32 2, %v958
        %v960 = vrot.slane %v487, %v959
        %v964 = vmul.f32 %v874, %v952
        %v965 = vmul.f32 %v876, %v956
        %v966 = vmul.f32 %v945, %v960
        %970 = vrot.lane.b32.xlu0 %v964, 19
        %v971 = vpop.permute.xlu0 %970
        %972 = vrot.lane.b32.xlu0 %v965, 19
        %v973 = vpop.permute.xlu0 %972
        %974 = vrot.lane.b32.xlu0 %v966, 19
        %v975 = vpop.permute.xlu0 %974
        %vm976 = vcmask 154624
        %v977 = vsel %vm976, %v971, %v973
        %v978 = vsel %vm976, %v973, %v975
        %vm982 = vcmask 1043608
        %983 = vst.msk [vmem:[#allocation3] sm:$0xf] %vm982, %v971
        %984 = vst [vmem:[#allocation3 + $0x8] sm:$0xf] %v977
        %vm985 = vcmask 707584
        %986 = vst.msk [vmem:[#allocation3 + $0x10] sm:$0xf] %vm985, %v978
        %v987 = vld [vmem:[%s486] sm:$0xff]
        %989 = vrot.lane.b32.xlu0 %v987, 38
        %v990 = vpop.permute.xlu0 %989
        %992 = vst.msk [vmem:[#allocation2] sm:$0xf] %vm500, %v990
        %993 = vrot.lane.b32.xlu0 %v987, 40
        %v994 = vpop.permute.xlu0 %993
        %996 = vst.msk [vmem:[#allocation2] sm:$0xf] %vm505, %v994
        %997 = vrot.lane.b32.xlu0 %v987, 42
        %v998 = vpop.permute.xlu0 %997
        %1000 = vst.msk [vmem:[#allocation2] sm:$0xf] %vm510, %v998
        %1001 = vrot.lane.b32.xlu0 %v987, 44
        %v1002 = vpop.permute.xlu0 %1001
        %1004 = vst.msk [vmem:[#allocation2] sm:$0xf] %vm515, %v1002
        %1005 = vrot.lane.b32.xlu0 %v987, 46
        %v1006 = vpop.permute.xlu0 %1005
        %1008 = vst.msk [vmem:[#allocation2] sm:$0xf] %vm520, %v1006
        %1009 = vrot.lane.b32.xlu0 %v987, 48
        %v1010 = vpop.permute.xlu0 %1009
        %1012 = vst.msk [vmem:[#allocation2 + $0x4] sm:$0xf] %vm525, %v1010
        %1013 = vrot.lane.b32.xlu0 %v987, 50
        %v1014 = vpop.permute.xlu0 %1013
        %1016 = vst.msk [vmem:[#allocation2 + $0x4] sm:$0xf] %vm530, %v1014
        %1017 = vrot.lane.b32.xlu0 %v987, 52
        %v1018 = vpop.permute.xlu0 %1017
        %1020 = vst.msk [vmem:[#allocation2 + $0x4] sm:$0xf] %vm535, %v1018
        %1021 = vrot.lane.b32.xlu0 %v987, 54
        %v1022 = vpop.permute.xlu0 %1021
        %v1023 = vrot.slane %v1022, 4
        %v1024 = vsel %vm540, %v1022, %v1023
        %1026 = vst.msk [vmem:[#allocation2 + $0x4] sm:$0xf] %vm543, %v1024
        %1027 = vrot.lane.b32.xlu0 %v987, 56
        %v1028 = vpop.permute.xlu0 %1027
        %v1029 = vrot.slane %v1028, 4
        %v1030 = vsel %vm548, %v1028, %v1029
        %1032 = vst.msk [vmem:[#allocation2 + $0x4] sm:$0xf] %vm551, %v1030
        %1033 = vrot.lane.b32.xlu0 %v987, 58
        %v1034 = vpop.permute.xlu0 %1033
        %v1035 = vrot.slane %v1034, 4
        %v1036 = vsel %vm556, %v1034, %v1035
        %1038 = vst.msk [vmem:[#allocation2 + $0x4] sm:$0xf] %vm559, %v1036
        %1039 = vrot.lane.b32.xlu0 %v987, 60
        %v1040 = vpop.permute.xlu0 %1039
        %v1041 = vrot.slane %v1040, 4
        %v1042 = vsel %vm564, %v1040, %v1041
        %1044 = vst.msk [vmem:[#allocation2 + $0x4] sm:$0xf] %vm567, %v1042
        %1045 = vrot.lane.b32.xlu0 %v987, 62
        %v1046 = vpop.permute.xlu0 %1045
        %v1047 = vrot.slane %v1046, 4
        %v1048 = vsel %vm572, %v1046, %v1047
        %1050 = vst.msk [vmem:[#allocation2 + $0x4] sm:$0xff] %vm577, %v1048
        %1051 = vrot.lane.b32.xlu0 %v987, 64
        %v1052 = vpop.permute.xlu0 %1051
        %v1053 = vrot.slane %v1052, 4
        %1055 = vst.msk [vmem:[#allocation2 + $0x8] sm:$0xf] %vm583, %v1053
        %1056 = vrot.lane.b32.xlu0 %v987, 66
        %v1057 = vpop.permute.xlu0 %1056
        %v1058 = vrot.slane %v1057, 4
        %1060 = vst.msk [vmem:[#allocation2 + $0x8] sm:$0xf] %vm589, %v1058
        %1061 = vrot.lane.b32.xlu0 %v987, 68
        %v1062 = vpop.permute.xlu0 %1061
        %v1063 = vrot.slane %v1062, 4
        %1065 = vst.msk [vmem:[#allocation2 + $0x8] sm:$0xf] %vm595, %v1063
        %v1066 = vld [vmem:[#allocation2] sm:$0xff]
        %v1067 = vld [vmem:[#allocation2 + $0x8] sm:$0xf]
        %v1069 = vcombine.high %v1066, %v1066
        %1071 = vst [vmem:[#allocation4] sm:$0xf] %v1066
        %1072 = vst [vmem:[#allocation4 + $0x8] sm:$0xf] %v1069
        %1073 = vst.msk [vmem:[#allocation4 + $0x10] sm:$0xf] %vm604, %v1067
        %v1074 = vld [vmem:[#allocation2] sm:$0xff]
        %v1075 = vld [vmem:[#allocation2 + $0x8] sm:$0xf]
        %v1078 = vcombine.low %v1074, %v1074
        %v1079 = vcombine.low %v1075, %v1075
        %1080 = vrot.lane.b32.xlu0 %v1078, 127
        %v1081 = vpop.permute.xlu0 %1080
        %1082 = vrot.lane.b32.xlu0 %v1074, 127
        %v1083 = vpop.permute.xlu0 %1082
        %1084 = vrot.lane.b32.xlu0 %v1079, 127
        %v1085 = vpop.permute.xlu0 %1084
        %v1086 = vsel %vm618, %v1081, %v1083
        %v1087 = vsel %vm618, %v1083, %v1085
        %1091 = vst [vmem:[#allocation4] sm:$0xf0] %v1086
        %1092 = vst [vmem:[#allocation4 + $0x8] sm:$0xf0] %v1087
        %1093 = vst.msk [vmem:[#allocation4 + $0x10] sm:$0xf0] %vm626, %v1085
        %v1094 = vld [vmem:[#allocation2] sm:$0xff]
        %v1095 = vld [vmem:[#allocation2 + $0x8] sm:$0xf]
        %v1098 = vcombine.high %v1094, %v1094
        %1099 = vrot.lane.b32.xlu0 %v1094, 126
        %v1100 = vpop.permute.xlu0 %1099
        %1101 = vrot.lane.b32.xlu0 %v1098, 126
        %v1102 = vpop.permute.xlu0 %1101
        %1103 = vrot.lane.b32.xlu0 %v1095, 126
        %v1104 = vpop.permute.xlu0 %1103
        %v1105 = vsel %vm639, %v1100, %v1102
        %v1106 = vsel %vm639, %v1102, %v1104
        %1110 = vst [vmem:[#allocation4 + $0x18] sm:$0xf] %v1105
        %1111 = vst [vmem:[#allocation4 + $0x20] sm:$0xf] %v1106
        %1112 = vst.msk [vmem:[#allocation4 + $0x28] sm:$0xf] %vm604, %v1104
        %v1113 = vld [vmem:[#allocation2] sm:$0xff]
        %v1114 = vld [vmem:[#allocation2 + $0x8] sm:$0xf]
        %v1117 = vcombine.low %v1113, %v1113
        %v1118 = vcombine.low %v1114, %v1114
        %1119 = vrot.lane.b32.xlu0 %v1117, 110
        %v1120 = vpop.permute.xlu0 %1119
        %1121 = vrot.lane.b32.xlu0 %v1113, 110
        %v1122 = vpop.permute.xlu0 %1121
        %1123 = vrot.lane.b32.xlu0 %v1118, 110
        %v1124 = vpop.permute.xlu0 %1123
        %v1125 = vsel %vm660, %v1120, %v1122
        %v1126 = vsel %vm660, %v1122, %v1124
        %1130 = vst [vmem:[#allocation4 + $0x18] sm:$0xf0] %v1125
        %1131 = vst [vmem:[#allocation4 + $0x20] sm:$0xf0] %v1126
        %1132 = vst.msk [vmem:[#allocation4 + $0x28] sm:$0xf0] %vm626, %v1124
        %v1133 = vld [vmem:[#allocation2] sm:$0xff]
        %v1134 = vld [vmem:[#allocation2 + $0x8] sm:$0xf]
        %v1137 = vcombine.high %v1133, %v1133
        %1138 = vrot.lane.b32.xlu0 %v1133, 109
        %v1139 = vpop.permute.xlu0 %1138
        %1140 = vrot.lane.b32.xlu0 %v1137, 109
        %v1141 = vpop.permute.xlu0 %1140
        %1142 = vrot.lane.b32.xlu0 %v1134, 109
        %v1143 = vpop.permute.xlu0 %1142
        %v1144 = vsel %vm680, %v1139, %v1141
        %v1145 = vsel %vm680, %v1141, %v1143
        %1149 = vst [vmem:[#allocation4 + $0x30] sm:$0xf] %v1144
        %1150 = vst [vmem:[#allocation4 + $0x38] sm:$0xf] %v1145
        %1151 = vst.msk [vmem:[#allocation4 + $0x40] sm:$0xf] %vm604, %v1143
        %v1152 = vld [vmem:[#allocation2] sm:$0xff]
        %v1153 = vld [vmem:[#allocation2 + $0x8] sm:$0xf]
        %v1156 = vcombine.low %v1152, %v1152
        %v1157 = vcombine.low %v1153, %v1153
        %1158 = vrot.lane.b32.xlu0 %v1156, 108
        %v1159 = vpop.permute.xlu0 %1158
        %1160 = vrot.lane.b32.xlu0 %v1152, 108
        %v1161 = vpop.permute.xlu0 %1160
        %1162 = vrot.lane.b32.xlu0 %v1157, 108
        %v1163 = vpop.permute.xlu0 %1162
        %v1164 = vsel %vm701, %v1159, %v1161
        %v1165 = vsel %vm701, %v1161, %v1163
        %1169 = vst [vmem:[#allocation4 + $0x30] sm:$0xf0] %v1164
        %1170 = vst [vmem:[#allocation4 + $0x38] sm:$0xf0] %v1165
        %1171 = vst.msk [vmem:[#allocation4 + $0x40] sm:$0xf0] %vm626, %v1163
        %v1172 = vld [vmem:[#allocation2] sm:$0xff]
        %v1173 = vld [vmem:[#allocation2 + $0x8] sm:$0xf]
        %v1176 = vcombine.high %v1172, %v1172
        %1177 = vrot.lane.b32.xlu0 %v1172, 92
        %v1178 = vpop.permute.xlu0 %1177
        %1179 = vrot.lane.b32.xlu0 %v1176, 92
        %v1180 = vpop.permute.xlu0 %1179
        %1181 = vrot.lane.b32.xlu0 %v1173, 92
        %v1182 = vpop.permute.xlu0 %1181
        %v1183 = vsel %vm721, %v1178, %v1180
        %v1184 = vsel %vm721, %v1180, %v1182
        %1188 = vst [vmem:[#allocation4 + $0x48] sm:$0xf] %v1183
        %1189 = vst [vmem:[#allocation4 + $0x50] sm:$0xf] %v1184
        %1190 = vst.msk [vmem:[#allocation4 + $0x58] sm:$0xf] %vm604, %v1182
        %v1191 = vld [vmem:[#allocation2] sm:$0xff]
        %v1192 = vld [vmem:[#allocation2 + $0x8] sm:$0xf]
        %v1195 = vcombine.low %v1191, %v1191
        %v1196 = vcombine.low %v1192, %v1192
        %1197 = vrot.lane.b32.xlu0 %v1195, 91
        %v1198 = vpop.permute.xlu0 %1197
        %1199 = vrot.lane.b32.xlu0 %v1191, 91
        %v1200 = vpop.permute.xlu0 %1199
        %1201 = vrot.lane.b32.xlu0 %v1196, 91
        %v1202 = vpop.permute.xlu0 %1201
        %v1203 = vsel %vm742, %v1198, %v1200
        %v1204 = vsel %vm742, %v1200, %v1202
        %1208 = vst [vmem:[#allocation4 + $0x48] sm:$0xf0] %v1203
        %1209 = vst [vmem:[#allocation4 + $0x50] sm:$0xf0] %v1204
        %1210 = vst.msk [vmem:[#allocation4 + $0x58] sm:$0xf0] %vm626, %v1202
        %v1211 = vld [vmem:[#allocation2] sm:$0xff]
        %v1212 = vld [vmem:[#allocation2 + $0x8] sm:$0xf]
        %v1215 = vcombine.high %v1211, %v1211
        %1216 = vrot.lane.b32.xlu0 %v1211, 90
        %v1217 = vpop.permute.xlu0 %1216
        %1218 = vrot.lane.b32.xlu0 %v1215, 90
        %v1219 = vpop.permute.xlu0 %1218
        %1220 = vrot.lane.b32.xlu0 %v1212, 90
        %v1221 = vpop.permute.xlu0 %1220
        %v1222 = vsel %vm762, %v1217, %v1219
        %v1223 = vsel %vm762, %v1219, %v1221
        %1227 = vst [vmem:[#allocation4 + $0x60] sm:$0xf] %v1222
        %1228 = vst [vmem:[#allocation4 + $0x68] sm:$0xf] %v1223
        %1229 = vst.msk [vmem:[#allocation4 + $0x70] sm:$0xf] %vm604, %v1221
        %v1230 = vld [vmem:[%s3] sm:$0xf]
        %v1231 = vld [vmem:[#allocation4] sm:$0xff]
        %v1232 = vld [vmem:[#allocation4 + $0x8] sm:$0xff]
        %v1233 = vld [vmem:[#allocation4 + $0x10] sm:$0xff]
        %v1234 = vld [vmem:[#allocation4 + $0x18] sm:$0xff]
        %v1235 = vld [vmem:[#allocation4 + $0x20] sm:$0xff]
        %v1236 = vld [vmem:[#allocation4 + $0x28] sm:$0xff]
        %v1237 = vld [vmem:[#allocation4 + $0x30] sm:$0xff]
        %v1238 = vld [vmem:[#allocation4 + $0x38] sm:$0xff]
        %v1239 = vld [vmem:[#allocation4 + $0x40] sm:$0xff]
        %v1240 = vld [vmem:[#allocation4 + $0x48] sm:$0xff]
        %v1241 = vld [vmem:[#allocation4 + $0x50] sm:$0xff]
        %v1242 = vld [vmem:[#allocation4 + $0x58] sm:$0xff]
        %v1243 = vld [vmem:[#allocation4 + $0x60] sm:$0xf]
        %v1244 = vld [vmem:[#allocation4 + $0x68] sm:$0xf]
        %v1245 = vld [vmem:[#allocation4 + $0x70] sm:$0xf]
        %v1246 = vld [vmem:[%s5] sm:$0xf]
        %1248 = vset.pattern.permute.xlu0 0
        %1249 = vperm.xlu0 %1248, %v1246
        %v1250 = vpop.permute.xlu0 %1249
        %v1253 = vsel %vm793, %v1230, 0
        %v1256 = vsel %vm797, %v1243, 0
        %v1259 = vsel %vm797, %v1244, 0
        %v1262 = vsel %vm797, %v1245, 0
        %1264 = vmatprep.subr.mxu0 %v1232
        %1265 = vmatpush1.msra.mxu0 %v1231
        %1266 = vmatprep.subr.mxu0 %v1235
        %1267 = vmatpush1.msra.mxu0 %v1234
        %1268 = vmatprep.subr.mxu0 %v1238
        %1269 = vmatpush1.msra.mxu0 %v1237
        %1270 = vmatprep.subr.mxu0 %v1241
        %1271 = vmatpush1.msra.mxu0 %v1240
        %1272 = vmatprep.subr.mxu0 %v1259
        %1273 = vmatpush1.msra.mxu0 %v1256
        %1274 = vmatprep.subr.mxu0 0.0
        %1275 = vmatpush1.msra.mxu0 0.0
        %1276 = vmatprep.subr.mxu0 0.0
        %1277 = vmatpush1.msra.mxu0 0.0
        %1278 = vmatprep.subr.mxu0 0.0
        %1279 = vmatpush1.msra.mxu0 0.0
        %1280 = vmatprep.subr.mxu0 0.0
        %1281 = vmatpush1.msra.mxu0 0.0
        %1282 = vmatprep.subr.mxu0 0.0
        %1283 = vmatpush1.msra.mxu0 0.0
        %1284 = vmatprep.subr.mxu0 0.0
        %1285 = vmatpush1.msra.mxu0 0.0
        %1286 = vmatprep.subr.mxu0 0.0
        %1287 = vmatpush1.msra.mxu0 0.0
        %1288 = vmatprep.subr.mxu0 0.0
        %1289 = vmatpush1.msra.mxu0 0.0
        %1290 = vmatprep.subr.mxu0 0.0
        %1291 = vmatpush1.msra.mxu0 0.0
        %1292 = vmatprep.subr.mxu0 0.0
        %1293 = vmatpush1.msra.mxu0 0.0
        %1294 = vmatprep.subr.mxu0 0.0
        %1295 = vmatpush1.msra.mxu0 0.0
        %1296 = vmatprep.subr.mxu0 0.0
        %1297 = vmatpush1.msra.mxu0 0.0
        %1298 = vmatprep.subr.mxu0 0.0
        %1299 = vmatpush1.msra.mxu0 0.0
        %1300 = vmatprep.subr.mxu0 0.0
        %1301 = vmatpush1.msra.mxu0 0.0
        %1302 = vmatprep.subr.mxu0 0.0
        %1303 = vmatpush1.msra.mxu0 0.0
        %1304 = vmatprep.subr.mxu0 0.0
        %1305 = vmatpush1.msra.mxu0 0.0
        %1306 = vmatprep.subr.mxu0 0.0
        %1307 = vmatpush1.msra.mxu0 0.0
        %1308 = vmatprep.subr.mxu0 0.0
        %1309 = vmatpush1.msra.mxu0 0.0
        %1310 = vmatprep.subr.mxu0 0.0
        %1311 = vmatpush1.msra.mxu0 0.0
        %1312 = vmatprep.subr.mxu0 0.0
        %1313 = vmatpush1.msra.mxu0 0.0
        %1314 = vmatprep.subr.mxu0 0.0
        %1315 = vmatpush1.msra.mxu0 0.0
        %1316 = vmatprep.subr.mxu0 0.0
        %1317 = vmatpush1.msra.mxu0 0.0
        %1318 = vmatprep.subr.mxu0 0.0
        %1319 = vmatpush1.msra.mxu0 0.0
        %1320 = vmatprep.subr.mxu0 0.0
        %1321 = vmatpush1.msra.mxu0 0.0
        %1322 = vmatprep.subr.mxu0 0.0
        %1323 = vmatpush1.msra.mxu0 0.0
        %1324 = vmatprep.subr.mxu0 0.0
        %1325 = vmatpush1.msra.mxu0 0.0
        %1326 = vmatprep.subr.mxu0 0.0
        %1327 = vmatpush1.msra.mxu0 0.0
        %1328 = vmatprep.mubr.f32.mxu0 0.0
        %1329 = vmatmul.mubr.f32.gmra.mrb[0].mxu0 %v1253
        %v1330 = vpop.f32.mrb[0].mxu0
        %v1331 = vadd.f32 %v1250, %v1330
        %v1332 = vpop.f32.mrb[0].mxu0
        %v1333 = vadd.f32 %v1250, %v1332
        %1334 = vdwg.mxu0
        %1335 = vmatprep.subr.mxu0 0.0
        %1336 = vmatpush1.msra.mxu0 %v1233
        %1337 = vmatprep.subr.mxu0 0.0
        %1338 = vmatpush1.msra.mxu0 %v1236
        %1339 = vmatprep.subr.mxu0 0.0
        %1340 = vmatpush1.msra.mxu0 %v1239
        %1341 = vmatprep.subr.mxu0 0.0
        %1342 = vmatpush1.msra.mxu0 %v1242
        %1343 = vmatprep.subr.mxu0 0.0
        %1344 = vmatpush1.msra.mxu0 %v1262
        %1345 = vmatprep.subr.mxu0 0.0
        %1346 = vmatpush1.msra.mxu0 0.0
        %1347 = vmatprep.subr.mxu0 0.0
        %1348 = vmatpush1.msra.mxu0 0.0
        %1349 = vmatprep.subr.mxu0 0.0
        %1350 = vmatpush1.msra.mxu0 0.0
        %1351 = vmatprep.subr.mxu0 0.0
        %1352 = vmatpush1.msra.mxu0 0.0
        %1353 = vmatprep.subr.mxu0 0.0
        %1354 = vmatpush1.msra.mxu0 0.0
        %1355 = vmatprep.subr.mxu0 0.0
        %1356 = vmatpush1.msra.mxu0 0.0
        %1357 = vmatprep.subr.mxu0 0.0
        %1358 = vmatpush1.msra.mxu0 0.0
        %1359 = vmatprep.subr.mxu0 0.0
        %1360 = vmatpush1.msra.mxu0 0.0
        %1361 = vmatprep.subr.mxu0 0.0
        %1362 = vmatpush1.msra.mxu0 0.0
        %1363 = vmatprep.subr.mxu0 0.0
        %1364 = vmatpush1.msra.mxu0 0.0
        %1365 = vmatprep.subr.mxu0 0.0
        %1366 = vmatpush1.msra.mxu0 0.0
        %1367 = vmatprep.subr.mxu0 0.0
        %1368 = vmatpush1.msra.mxu0 0.0
        %1369 = vmatprep.subr.mxu0 0.0
        %1370 = vmatpush1.msra.mxu0 0.0
        %1371 = vmatprep.subr.mxu0 0.0
        %1372 = vmatpush1.msra.mxu0 0.0
        %1373 = vmatprep.subr.mxu0 0.0
        %1374 = vmatpush1.msra.mxu0 0.0
        %1375 = vmatprep.subr.mxu0 0.0
        %1376 = vmatpush1.msra.mxu0 0.0
        %1377 = vmatprep.subr.mxu0 0.0
        %1378 = vmatpush1.msra.mxu0 0.0
        %1379 = vmatprep.subr.mxu0 0.0
        %1380 = vmatpush1.msra.mxu0 0.0
        %1381 = vmatprep.subr.mxu0 0.0
        %1382 = vmatpush1.msra.mxu0 0.0
        %1383 = vmatprep.subr.mxu0 0.0
        %1384 = vmatpush1.msra.mxu0 0.0
        %1385 = vmatprep.subr.mxu0 0.0
        %1386 = vmatpush1.msra.mxu0 0.0
        %1387 = vmatprep.subr.mxu0 0.0
        %1388 = vmatpush1.msra.mxu0 0.0
        %1389 = vmatprep.subr.mxu0 0.0
        %1390 = vmatpush1.msra.mxu0 0.0
        %1391 = vmatprep.subr.mxu0 0.0
        %1392 = vmatpush1.msra.mxu0 0.0
        %1393 = vmatprep.subr.mxu0 0.0
        %1394 = vmatpush1.msra.mxu0 0.0
        %1395 = vmatprep.subr.mxu0 0.0
        %1396 = vmatpush1.msra.mxu0 0.0
        %1397 = vmatprep.subr.mxu0 0.0
        %1398 = vmatpush1.msra.mxu0 0.0
        %1399 = vmatprep.mubr.f32.mxu0 0.0
        %1400 = vmatmul.mubr.f32.gmra.mrb[0].mxu0 %v1253
        %v1401 = vpop.f32.mrb[0].mxu0
        %v1402 = vadd.f32 %v1250, %v1401
        %v1403 = vpop.f32.mrb[0].mxu0
        %1404 = vdwg.mxu0
        %v1405 = vmul.f32 %v1331, %v952
        %v1406 = vmul.f32 %v1333, %v956
        %v1407 = vmul.f32 %v1402, %v960
        %v1411 = vrot.slane %v1405, 4
        %v1412 = vrot.slane %v1406, 4
        %v1413 = vrot.slane %v1407, 4
        %1414 = vrot.lane.b32.xlu0 %v1411, 19
        %v1415 = vpop.permute.xlu0 %1414
        %1416 = vrot.lane.b32.xlu0 %v1412, 19
        %v1417 = vpop.permute.xlu0 %1416
        %1418 = vrot.lane.b32.xlu0 %v1413, 19
        %v1419 = vpop.permute.xlu0 %1418
        %v1420 = vsel %vm976, %v1415, %v1417
        %v1421 = vsel %vm976, %v1417, %v1419
        %vm1425 = vcmask 1047708
        %1426 = vst.msk [vmem:[#allocation3] sm:$0xf0] %vm1425, %v1415
        %1427 = vst [vmem:[#allocation3 + $0x8] sm:$0xf0] %v1420
        %vm1428 = vcmask 711684
        %1429 = vst.msk [vmem:[#allocation3 + $0x10] sm:$0xf0] %vm1428, %v1421
        %v1430 = vld [vmem:[#allocation3] sm:$0xff]
        %v1431 = vld [vmem:[#allocation3 + $0x8] sm:$0xff]
        %v1432 = vld [vmem:[#allocation3 + $0x10] sm:$0xff]
        %v1433 = vadd.f32 %v1430, %v1431
        %v1434 = vsel %vm493, %v1432, 0.0
        %v1435 = vadd.f32 %v1433, %v1434
        %1436 = vadd.xlane.f32.xlu0 %v1435
        %v1437 = vpop.xlane.xlu0 %1436
        %v1438 = vmul.f32 %v1437, 0.00390625
        %v1439 = vld [vmem:[%s7] sm:$0xff]
        %v1440 = vmul.f32 %v1439, %v1438
        %vm1441 = vcmask 15360
        %v1442 = vsel %vm1441, %v1440, 0.0
        %v1443 = vrot.slane %v1442, 4
        %v1444 = vadd.f32 %v1442, %v1443
        %v1445 = vrot.slane %v1444, 2
        %v1446 = vadd.f32 %v1444, %v1445
        %v1447 = vrot.slane %v1446, 1
        %v1448 = vadd.f32 %v1446, %v1447
        %v1449 = vld [vmem:[%s8] sm:$0x1]
        %v1450 = vadd.f32 %v1448, %v1449
        %v1451 = vmax.f32 %v1450, 0.0
        %v1452 = vld [vmem:[%s9] sm:$0xff]
        %v1453 = vlaneseq
        %v1454 = vshrl.u32 %v1453, 7
        %v1455 = vsub.s32 0, %v1454
        %v1456 = vrot.slane %v1451, %v1455
        %v1457 = vmul.f32 %v1452, %v1456
        %v1458 = vsel %vm1441, %v1457, 0.0
        %1459 = vadd.xlane.f32.xlu0 %v1458
        %v1460 = vpop.xlane.xlu0 %1459
        %v1461 = vld [vmem:[%s10] sm:$0xff]
        %v1462 = vadd.f32 %v1460, %v1461
        %v1463 = vxor.u32 %v1462, 2147483648
        %v1464 = vmul.f32 %v1463, 1.442695
        %v1465 = vpow.pop %v1464
        %v1466 = vadd.f32 %v1465, 1.0
        %v1467 = vrcp.pop %v1466
        %v1468 = vmul.f32 1.0, %v1467
        %1470 = vset.pattern.permute.xlu0 0
        %1471 = vperm.xlu0 %1470, %v1468
        %v1472 = vpop.permute.xlu0 %1471
        %v1474 = vmul.f32 %v1430, %v1472
        %v1475 = vmul.f32 %v1431, %v1472
        %v1476 = vmul.f32 %v1432, %v1472
        %1477 = vst [vmem:[#allocation4] sm:$0xff] %v1474
        %1478 = vst [vmem:[#allocation4 + $0x8] sm:$0xff] %v1475
        %vm1479 = vcmask 556032
        %1480 = vst.msk [vmem:[#allocation4 + $0x10] sm:$0xff] %vm1479, %v1476
        %v1481 = vld [vmem:[#allocation3] sm:$0xff]
        %v1482 = vld [vmem:[#allocation3 + $0x8] sm:$0xff]
        %v1483 = vld [vmem:[#allocation3 + $0x10] sm:$0xff]
        %v1484 = vmul.f32 %v1481, %v1472
        %v1485 = vmul.f32 %v1482, %v1472
        %v1486 = vmul.f32 %v1483, %v1472
        %1490 = vrot.lane.b32.xlu0 %v1484, 127
        %v1491 = vpop.permute.xlu0 %1490
        %1492 = vrot.lane.b32.xlu0 %v1485, 127
        %v1493 = vpop.permute.xlu0 %1492
        %1494 = vrot.lane.b32.xlu0 %v1486, 127
        %v1495 = vpop.permute.xlu0 %1494
        %v1496 = vsel %vm618, %v1491, %v1493
        %v1497 = vsel %vm618, %v1493, %v1495
        %1501 = vst [vmem:[#allocation4 + $0x18] sm:$0xff] %v1496
        %1502 = vst [vmem:[#allocation4 + $0x20] sm:$0xff] %v1497
        %1503 = vst.msk [vmem:[#allocation4 + $0x28] sm:$0xff] %vm1479, %v1495
        %v1504 = vld [vmem:[#allocation3] sm:$0xff]
        %v1505 = vld [vmem:[#allocation3 + $0x8] sm:$0xff]
        %v1506 = vld [vmem:[#allocation3 + $0x10] sm:$0xff]
        %v1507 = vmul.f32 %v1504, %v1472
        %v1508 = vmul.f32 %v1505, %v1472
        %v1509 = vmul.f32 %v1506, %v1472
        %1513 = vrot.lane.b32.xlu0 %v1507, 126
        %v1514 = vpop.permute.xlu0 %1513
        %1515 = vrot.lane.b32.xlu0 %v1508, 126
        %v1516 = vpop.permute.xlu0 %1515
        %1517 = vrot.lane.b32.xlu0 %v1509, 126
        %v1518 = vpop.permute.xlu0 %1517
        %v1519 = vsel %vm639, %v1514, %v1516
        %v1520 = vsel %vm639, %v1516, %v1518
        %1524 = vst [vmem:[#allocation4 + $0x30] sm:$0xff] %v1519
        %1525 = vst [vmem:[#allocation4 + $0x38] sm:$0xff] %v1520
        %1526 = vst.msk [vmem:[#allocation4 + $0x40] sm:$0xff] %vm1479, %v1518
        %v1527 = vld [vmem:[#allocation3] sm:$0xff]
        %v1528 = vld [vmem:[#allocation3 + $0x8] sm:$0xff]
        %v1529 = vld [vmem:[#allocation3 + $0x10] sm:$0xff]
        %v1530 = vmul.f32 %v1527, %v1472
        %v1531 = vmul.f32 %v1528, %v1472
        %v1532 = vmul.f32 %v1529, %v1472
        %1536 = vrot.lane.b32.xlu0 %v1530, 110
        %v1537 = vpop.permute.xlu0 %1536
        %1538 = vrot.lane.b32.xlu0 %v1531, 110
        %v1539 = vpop.permute.xlu0 %1538
        %1540 = vrot.lane.b32.xlu0 %v1532, 110
        %v1541 = vpop.permute.xlu0 %1540
        %v1542 = vsel %vm660, %v1537, %v1539
        %v1543 = vsel %vm660, %v1539, %v1541
        %1547 = vst [vmem:[#allocation4 + $0x48] sm:$0xff] %v1542
        %1548 = vst [vmem:[#allocation4 + $0x50] sm:$0xff] %v1543
        %1549 = vst.msk [vmem:[#allocation4 + $0x58] sm:$0xff] %vm1479, %v1541
        %v1550 = vld [vmem:[#allocation3] sm:$0xff]
        %v1551 = vld [vmem:[#allocation3 + $0x8] sm:$0xff]
        %v1552 = vld [vmem:[#allocation3 + $0x10] sm:$0xff]
        %v1553 = vmul.f32 %v1550, %v1472
        %v1554 = vmul.f32 %v1551, %v1472
        %v1555 = vmul.f32 %v1552, %v1472
        %1559 = vrot.lane.b32.xlu0 %v1553, 109
        %v1560 = vpop.permute.xlu0 %1559
        %1561 = vrot.lane.b32.xlu0 %v1554, 109
        %v1562 = vpop.permute.xlu0 %1561
        %1563 = vrot.lane.b32.xlu0 %v1555, 109
        %v1564 = vpop.permute.xlu0 %1563
        %v1565 = vsel %vm680, %v1560, %v1562
        %v1566 = vsel %vm680, %v1562, %v1564
        %1570 = vst [vmem:[#allocation4 + $0x60] sm:$0xff] %v1565
        %1571 = vst [vmem:[#allocation4 + $0x68] sm:$0xff] %v1566
        %1572 = vst.msk [vmem:[#allocation4 + $0x70] sm:$0xff] %vm1479, %v1564
        %v1573 = vld [vmem:[#allocation3] sm:$0xff]
        %v1574 = vld [vmem:[#allocation3 + $0x8] sm:$0xff]
        %v1575 = vld [vmem:[#allocation3 + $0x10] sm:$0xff]
        %v1576 = vmul.f32 %v1573, %v1472
        %v1577 = vmul.f32 %v1574, %v1472
        %v1578 = vmul.f32 %v1575, %v1472
        %1582 = vrot.lane.b32.xlu0 %v1576, 108
        %v1583 = vpop.permute.xlu0 %1582
        %1584 = vrot.lane.b32.xlu0 %v1577, 108
        %v1585 = vpop.permute.xlu0 %1584
        %1586 = vrot.lane.b32.xlu0 %v1578, 108
        %v1587 = vpop.permute.xlu0 %1586
        %v1588 = vsel %vm701, %v1583, %v1585
        %v1589 = vsel %vm701, %v1585, %v1587
        %1593 = vst [vmem:[#allocation4 + $0x78] sm:$0xff] %v1588
        %1594 = vst [vmem:[#allocation4 + $0x80] sm:$0xff] %v1589
        %1595 = vst.msk [vmem:[#allocation4 + $0x88] sm:$0xff] %vm1479, %v1587
        %v1596 = vld [vmem:[#allocation3] sm:$0xff]
        %v1597 = vld [vmem:[#allocation3 + $0x8] sm:$0xff]
        %v1598 = vld [vmem:[#allocation3 + $0x10] sm:$0xff]
        %v1599 = vmul.f32 %v1596, %v1472
        %v1600 = vmul.f32 %v1597, %v1472
        %v1601 = vmul.f32 %v1598, %v1472
        %1605 = vrot.lane.b32.xlu0 %v1599, 92
        %v1606 = vpop.permute.xlu0 %1605
        %1607 = vrot.lane.b32.xlu0 %v1600, 92
        %v1608 = vpop.permute.xlu0 %1607
        %1609 = vrot.lane.b32.xlu0 %v1601, 92
        %v1610 = vpop.permute.xlu0 %1609
        %v1611 = vsel %vm721, %v1606, %v1608
        %v1612 = vsel %vm721, %v1608, %v1610
        %1616 = vst [vmem:[#allocation4 + $0x90] sm:$0xff] %v1611
        %1617 = vst [vmem:[#allocation4 + $0x98] sm:$0xff] %v1612
        %1618 = vst.msk [vmem:[#allocation4 + $0xa0] sm:$0xff] %vm1479, %v1610
        %v1619 = vld [vmem:[#allocation3] sm:$0xff]
        %v1620 = vld [vmem:[#allocation3 + $0x8] sm:$0xff]
        %v1621 = vld [vmem:[#allocation3 + $0x10] sm:$0xff]
        %v1622 = vmul.f32 %v1619, %v1472
        %v1623 = vmul.f32 %v1620, %v1472
        %v1624 = vmul.f32 %v1621, %v1472
        %1628 = vrot.lane.b32.xlu0 %v1622, 91
        %v1629 = vpop.permute.xlu0 %1628
        %1630 = vrot.lane.b32.xlu0 %v1623, 91
        %v1631 = vpop.permute.xlu0 %1630
        %1632 = vrot.lane.b32.xlu0 %v1624, 91
        %v1633 = vpop.permute.xlu0 %1632
        %v1634 = vsel %vm742, %v1629, %v1631
        %v1635 = vsel %vm742, %v1631, %v1633
        %1639 = vst [vmem:[#allocation4 + $0xa8] sm:$0xff] %v1634
        %1640 = vst [vmem:[#allocation4 + $0xb0] sm:$0xff] %v1635
        %1641 = vst.msk [vmem:[#allocation4 + $0xb8] sm:$0xff] %vm1479, %v1633
        %v1642 = vld [vmem:[#allocation3] sm:$0xff]
        %v1643 = vld [vmem:[#allocation3 + $0x8] sm:$0xff]
        %v1644 = vld [vmem:[#allocation3 + $0x10] sm:$0xff]
        %v1645 = vmul.f32 %v1642, %v1472
        %v1646 = vmul.f32 %v1643, %v1472
        %v1647 = vmul.f32 %v1644, %v1472
        %1651 = vrot.lane.b32.xlu0 %v1645, 90
        %v1652 = vpop.permute.xlu0 %1651
        %1653 = vrot.lane.b32.xlu0 %v1646, 90
        %v1654 = vpop.permute.xlu0 %1653
        %1655 = vrot.lane.b32.xlu0 %v1647, 90
        %v1656 = vpop.permute.xlu0 %1655
        %v1657 = vsel %vm762, %v1652, %v1654
        %v1658 = vsel %vm762, %v1654, %v1656
        %1662 = vst [vmem:[#allocation4 + $0xc0] sm:$0xff] %v1657
        %1663 = vst [vmem:[#allocation4 + $0xc8] sm:$0xff] %v1658
        %1664 = vst.msk [vmem:[#allocation4 + $0xd0] sm:$0xff] %vm1479, %v1656
        %v1665 = vld [vmem:[%s11] sm:$0xf]
        %v1666 = vld [vmem:[#allocation4] sm:$0xff]
        %v1667 = vld [vmem:[#allocation4 + $0x8] sm:$0xff]
        %v1668 = vld [vmem:[#allocation4 + $0x10] sm:$0xff]
        %v1669 = vld [vmem:[#allocation4 + $0x18] sm:$0xff]
        %v1670 = vld [vmem:[#allocation4 + $0x20] sm:$0xff]
        %v1671 = vld [vmem:[#allocation4 + $0x28] sm:$0xff]
        %v1672 = vld [vmem:[#allocation4 + $0x30] sm:$0xff]
        %v1673 = vld [vmem:[#allocation4 + $0x38] sm:$0xff]
        %v1674 = vld [vmem:[#allocation4 + $0x40] sm:$0xff]
        %v1675 = vld [vmem:[#allocation4 + $0x48] sm:$0xff]
        %v1676 = vld [vmem:[#allocation4 + $0x50] sm:$0xff]
        %v1677 = vld [vmem:[#allocation4 + $0x58] sm:$0xff]
        %v1678 = vld [vmem:[#allocation4 + $0x60] sm:$0xff]
        %v1679 = vld [vmem:[#allocation4 + $0x68] sm:$0xff]
        %v1680 = vld [vmem:[#allocation4 + $0x70] sm:$0xff]
        %v1681 = vld [vmem:[#allocation4 + $0x78] sm:$0xff]
        %v1682 = vld [vmem:[#allocation4 + $0x80] sm:$0xff]
        %v1683 = vld [vmem:[#allocation4 + $0x88] sm:$0xff]
        %v1684 = vld [vmem:[#allocation4 + $0x90] sm:$0xff]
        %v1685 = vld [vmem:[#allocation4 + $0x98] sm:$0xff]
        %v1686 = vld [vmem:[#allocation4 + $0xa0] sm:$0xff]
        %v1687 = vld [vmem:[#allocation4 + $0xa8] sm:$0xff]
        %v1688 = vld [vmem:[#allocation4 + $0xb0] sm:$0xff]
        %v1689 = vld [vmem:[#allocation4 + $0xb8] sm:$0xff]
        %v1690 = vld [vmem:[#allocation4 + $0xc0] sm:$0xff]
        %v1691 = vld [vmem:[#allocation4 + $0xc8] sm:$0xff]
        %v1692 = vld [vmem:[#allocation4 + $0xd0] sm:$0xff]
        %v1693 = vld [vmem:[%s12] sm:$0xf]
        %1695 = vset.pattern.permute.xlu0 0
        %1696 = vperm.xlu0 %1695, %v1693
        %v1697 = vpop.permute.xlu0 %1696
        %vm1699 = vcmask 588800
        %v1701 = vsel %vm1699, %v1665, 0
        %1703 = vmatprep.subr.mxu0 %v1667
        %1704 = vmatpush1.msra.mxu0 %v1666
        %1705 = vmatprep.subr.mxu0 %v1670
        %1706 = vmatpush1.msra.mxu0 %v1669
        %1707 = vmatprep.subr.mxu0 %v1673
        %1708 = vmatpush1.msra.mxu0 %v1672
        %1709 = vmatprep.subr.mxu0 %v1676
        %1710 = vmatpush1.msra.mxu0 %v1675
        %1711 = vmatprep.subr.mxu0 %v1679
        %1712 = vmatpush1.msra.mxu0 %v1678
        %1713 = vmatprep.subr.mxu0 %v1682
        %1714 = vmatpush1.msra.mxu0 %v1681
        %1715 = vmatprep.subr.mxu0 %v1685
        %1716 = vmatpush1.msra.mxu0 %v1684
        %1717 = vmatprep.subr.mxu0 %v1688
        %1718 = vmatpush1.msra.mxu0 %v1687
        %1719 = vmatprep.subr.mxu0 %v1691
        %1720 = vmatpush1.msra.mxu0 %v1690
        %1721 = vmatprep.subr.mxu0 0.0
        %1722 = vmatpush1.msra.mxu0 0.0
        %1723 = vmatprep.subr.mxu0 0.0
        %1724 = vmatpush1.msra.mxu0 0.0
        %1725 = vmatprep.subr.mxu0 0.0
        %1726 = vmatpush1.msra.mxu0 0.0
        %1727 = vmatprep.subr.mxu0 0.0
        %1728 = vmatpush1.msra.mxu0 0.0
        %1729 = vmatprep.subr.mxu0 0.0
        %1730 = vmatpush1.msra.mxu0 0.0
        %1731 = vmatprep.subr.mxu0 0.0
        %1732 = vmatpush1.msra.mxu0 0.0
        %1733 = vmatprep.subr.mxu0 0.0
        %1734 = vmatpush1.msra.mxu0 0.0
        %1735 = vmatprep.subr.mxu0 0.0
        %1736 = vmatpush1.msra.mxu0 0.0
        %1737 = vmatprep.subr.mxu0 0.0
        %1738 = vmatpush1.msra.mxu0 0.0
        %1739 = vmatprep.subr.mxu0 0.0
        %1740 = vmatpush1.msra.mxu0 0.0
        %1741 = vmatprep.subr.mxu0 0.0
        %1742 = vmatpush1.msra.mxu0 0.0
        %1743 = vmatprep.subr.mxu0 0.0
        %1744 = vmatpush1.msra.mxu0 0.0
        %1745 = vmatprep.subr.mxu0 0.0
        %1746 = vmatpush1.msra.mxu0 0.0
        %1747 = vmatprep.subr.mxu0 0.0
        %1748 = vmatpush1.msra.mxu0 0.0
        %1749 = vmatprep.subr.mxu0 0.0
        %1750 = vmatpush1.msra.mxu0 0.0
        %1751 = vmatprep.subr.mxu0 0.0
        %1752 = vmatpush1.msra.mxu0 0.0
        %1753 = vmatprep.subr.mxu0 0.0
        %1754 = vmatpush1.msra.mxu0 0.0
        %1755 = vmatprep.subr.mxu0 0.0
        %1756 = vmatpush1.msra.mxu0 0.0
        %1757 = vmatprep.subr.mxu0 0.0
        %1758 = vmatpush1.msra.mxu0 0.0
        %1759 = vmatprep.subr.mxu0 0.0
        %1760 = vmatpush1.msra.mxu0 0.0
        %1761 = vmatprep.subr.mxu0 0.0
        %1762 = vmatpush1.msra.mxu0 0.0
        %1763 = vmatprep.subr.mxu0 0.0
        %1764 = vmatpush1.msra.mxu0 0.0
        %1765 = vmatprep.subr.mxu0 0.0
        %1766 = vmatpush1.msra.mxu0 0.0
        %1767 = vmatprep.mubr.f32.mxu0 0.0
        %1768 = vmatmul.mubr.f32.gmra.mrb[0].mxu0 %v1701
        %v1769 = vpop.f32.mrb[0].mxu0
        %v1770 = vadd.f32 %v1697, %v1769
        %v1771 = vpop.f32.mrb[0].mxu0
        %v1772 = vadd.f32 %v1697, %v1771
        %1773 = vdwg.mxu0
        %1774 = vmatprep.subr.mxu0 0.0
        %1775 = vmatpush1.msra.mxu0 %v1668
        %1776 = vmatprep.subr.mxu0 0.0
        %1777 = vmatpush1.msra.mxu0 %v1671
        %1778 = vmatprep.subr.mxu0 0.0
        %1779 = vmatpush1.msra.mxu0 %v1674
        %1780 = vmatprep.subr.mxu0 0.0
        %1781 = vmatpush1.msra.mxu0 %v1677
        %1782 = vmatprep.subr.mxu0 0.0
        %1783 = vmatpush1.msra.mxu0 %v1680
        %1784 = vmatprep.subr.mxu0 0.0
        %1785 = vmatpush1.msra.mxu0 %v1683
        %1786 = vmatprep.subr.mxu0 0.0
        %1787 = vmatpush1.msra.mxu0 %v1686
        %1788 = vmatprep.subr.mxu0 0.0
        %1789 = vmatpush1.msra.mxu0 %v1689
        %1790 = vmatprep.subr.mxu0 0.0
        %1791 = vmatpush1.msra.mxu0 %v1692
        %1792 = vmatprep.subr.mxu0 0.0
        %1793 = vmatpush1.msra.mxu0 0.0
        %1794 = vmatprep.subr.mxu0 0.0
        %1795 = vmatpush1.msra.mxu0 0.0
        %1796 = vmatprep.subr.mxu0 0.0
        %1797 = vmatpush1.msra.mxu0 0.0
        %1798 = vmatprep.subr.mxu0 0.0
        %1799 = vmatpush1.msra.mxu0 0.0
        %1800 = vmatprep.subr.mxu0 0.0
        %1801 = vmatpush1.msra.mxu0 0.0
        %1802 = vmatprep.subr.mxu0 0.0
        %1803 = vmatpush1.msra.mxu0 0.0
        %1804 = vmatprep.subr.mxu0 0.0
        %1805 = vmatpush1.msra.mxu0 0.0
        %1806 = vmatprep.subr.mxu0 0.0
        %1807 = vmatpush1.msra.mxu0 0.0
        %1808 = vmatprep.subr.mxu0 0.0
        %1809 = vmatpush1.msra.mxu0 0.0
        %1810 = vmatprep.subr.mxu0 0.0
        %1811 = vmatpush1.msra.mxu0 0.0
        %1812 = vmatprep.subr.mxu0 0.0
        %1813 = vmatpush1.msra.mxu0 0.0
        %1814 = vmatprep.subr.mxu0 0.0
        %1815 = vmatpush1.msra.mxu0 0.0
        %1816 = vmatprep.subr.mxu0 0.0
        %1817 = vmatpush1.msra.mxu0 0.0
        %1818 = vmatprep.subr.mxu0 0.0
        %1819 = vmatpush1.msra.mxu0 0.0
        %1820 = vmatprep.subr.mxu0 0.0
        %1821 = vmatpush1.msra.mxu0 0.0
        %1822 = vmatprep.subr.mxu0 0.0
        %1823 = vmatpush1.msra.mxu0 0.0
        %1824 = vmatprep.subr.mxu0 0.0
        %1825 = vmatpush1.msra.mxu0 0.0
        %1826 = vmatprep.subr.mxu0 0.0
        %1827 = vmatpush1.msra.mxu0 0.0
        %1828 = vmatprep.subr.mxu0 0.0
        %1829 = vmatpush1.msra.mxu0 0.0
        %1830 = vmatprep.subr.mxu0 0.0
        %1831 = vmatpush1.msra.mxu0 0.0
        %1832 = vmatprep.subr.mxu0 0.0
        %1833 = vmatpush1.msra.mxu0 0.0
        %1834 = vmatprep.subr.mxu0 0.0
        %1835 = vmatpush1.msra.mxu0 0.0
        %1836 = vmatprep.subr.mxu0 0.0
        %1837 = vmatpush1.msra.mxu0 0.0
        %1838 = vmatprep.mubr.f32.mxu0 0.0
        %1839 = vmatmul.mubr.f32.gmra.mrb[0].mxu0 %v1701
        %v1840 = vpop.f32.mrb[0].mxu0
        %v1841 = vadd.f32 %v1697, %v1840
        %v1842 = vpop.f32.mrb[0].mxu0
        %1843 = vdwg.mxu0
        %s1844 = sld [smem:[#allocation5]]
        %vm1845 = vcmp.ge.f32.partialorder %v1770, 0.0
        %vm1846 = vcmp.ge.f32.partialorder %v1772, 0.0
        %vm1847 = vcmp.ge.f32.partialorder %v1841, 0.0
        %v1848 = vstv %s1844
        %v1849 = vmul.f32 %v1848, %v1770
        %v1850 = vmul.f32 %v1848, %v1772
        %v1851 = vmul.f32 %v1848, %v1841
        %v1852 = vsel %vm1845, %v1770, %v1849
        %v1853 = vsel %vm1846, %v1772, %v1850
        %v1854 = vsel %vm1847, %v1841, %v1851
        %v1857 = vcombine.low %v1852, %v1853
        %1859 = vst [vmem:[%s476] sm:$0xff] %v1857
        %1860 = vst.msk [vmem:[%s476 + $0x8] sm:$0xf] %vm604, %v1854
        %s1861 = sand.u32 %s341, 1
        %s1862 = scalar_lea.sflag [#allocation7], %s1861
        %s1863 = sand.u32 %s341, 1
        %s1864 = smul.addr %s1863, 12
        %s1865 = scalar_lea.vmem [#allocation6], %s1864
        // Predicated region
        $region77: #{tpu_custom_call.1} parent=75 // pred_check
          %p1866 = pneg %p351
        $region78: #{tpu_custom_call.1} parent=75 // pred_check_branch
          %1868 = sbr.rel (%p1866) target = $region80
        $region79: #{tpu_custom_call.1} parent=75 // pred_region
          %s1870 = ssub.s32 192, 192
          %1871 = vsyncadd %s1862, %s1870
          %s1872 = smul.addr %s29, 3
          %s1873 = smul.addr %s1872, 64
          %s1874 = scalar_lea.hbm %s14, %s1873
          %s1876 = sshll.u32 %s1865, 4
          %s1877 = int_to_ptr.vmem [resolvable:$true] %s1876
          %1879 = dma.vmem_to_hbm [thread:$0]  %s1877, 192, %s1874, %s1862
        $region80: #{tpu_custom_call.1} parent=75 // pred_fallthru
          _
      $region76: #{tpu_custom_call.1} parent=5 // pred_fallthru
        _
      %p1880 = scmp.le.s32.totalorder 2, %s24
      // Predicated region
      $region81: #{tpu_custom_call.1} parent=5 // pred_check
        %p1881 = pneg %p1880
      $region82: #{tpu_custom_call.1} parent=5 // pred_check_branch
        %1883 = sbr.rel (%p1881) target = $region84
      $region83: #{tpu_custom_call.1} parent=5 // pred_region
        %s1884 = ssub.s32 %s24, 2
        // Predicated region
        $region85: #{tpu_custom_call.1} parent=83 // pred_check
          %p1885 = pneg %p357
        $region86: #{tpu_custom_call.1} parent=83 // pred_check_branch
          %1887 = sbr.rel (%p1885) target = $region88
        $region87: #{tpu_custom_call.1} parent=83 // pred_region
          %s1888 = sand.u32 %s342, 1
          %s1889 = scalar_lea.sflag [#allocation7], %s1888
          %s1890 = sand.u32 %s342, 1
          %s1891 = smul.addr %s1890, 12
          %s1892 = scalar_lea.vmem [#allocation6], %s1891
          %1893 = dma.done %s1889, 192
        $region88: #{tpu_custom_call.1} parent=83 // pred_fallthru
          _
      $region84: #{tpu_custom_call.1} parent=5 // pred_fallthru
        _
    $region6: #{tpu_custom_call.1} parent=1 // loop_footer
      %s28 = sadd.s32 1, %s24
    $region7: #{tpu_custom_call.1} parent=1 // loop_footer_branch
      %23 = sbr.rel target = $region3
    $region8: #{tpu_custom_call.1} parent=1 // loop_exit
      _
    %1894 = vsyncpa [#allocation7], 1
    %s1895 = scalar_lea.sflag [#allocation7], 1
    %1896 = vsyncpa %s1895, 1

</llo_original>
